<compile_context>
chip_gen: v6e
topology: v6e:2x2x1
jax: 0.10.0
libtpu: 0.0.40
codegen_flags: <defaults>
</compile_context>

<pallas_src>
import functools

import jax
import jax.numpy as jnp
from jax import lax
from jax.experimental import pallas as pl
from jax.experimental.pallas import tpu as pltpu

NEG_SLOPE = 0.2
BN_EPS = 1e-5
NEG_INF = -1e30


def _vmem_spec():
    # everything here is tiny: keep whole arrays resident in VMEM
    return pl.BlockSpec(memory_space=pltpu.MemorySpace.VMEM)


def _leaky(x):
    return jnp.where(x > 0, x, NEG_SLOPE * x)


def _batchnorm(z, gamma, beta):
    # training-mode torch BatchNorm1d: biased batch statistics over all nodes
    n = z.shape[0]
    mean = jnp.sum(z, axis=0, keepdims=True) * (1.0 / n)
    zc = z - mean
    var = jnp.sum(zc * zc, axis=0, keepdims=True) * (1.0 / n)
    return zc * lax.rsqrt(var + BN_EPS) * gamma + beta


# ------------------------- host-side parameter packing ------------------------
def _pack_matrices(mats):
    """Pack named 2-D arrays row-wise into one [R, 256] slab (8-row aligned)."""
    layout, rows, cols = {}, 0, 0
    for name, a in mats:
        layout[name] = (rows, a.shape[0], a.shape[1])
        rows += ((a.shape[0] + 7) // 8) * 8
        cols = max(cols, a.shape[1])
    cols = ((cols + 127) // 128) * 128
    pack = jnp.zeros((rows, cols), jnp.float32)
    for name, a in mats:
        r0, r, c = layout[name]
        pack = pack.at[r0:r0 + r, :c].set(a.astype(jnp.float32))
    return pack, layout


def _pack_vectors(vecs):
    """Pack named [1, K] arrays lane-wise (128-aligned offsets) into [1, L]."""
    layout, off = {}, 0
    for name, a in vecs:
        w = a.shape[-1]
        layout[name] = (off, w)
        off += ((w + 127) // 128) * 128
    pack = jnp.zeros((1, off), jnp.float32)
    for name, a in vecs:
        o, w = layout[name]
        pack = pack.at[0, o:o + w].set(a.reshape(-1).astype(jnp.float32))
    return pack, layout


# --------------------------------- the kernel ---------------------------------
def _fused_gat_kernel(x_ref, bias_ref, w_ref, v_ref, o_ref, *,
                      heads, hid, batch, layout_w, layout_v):
    f32 = jnp.float32
    bf16 = jnp.bfloat16

    def W(name):                                    # static slice of bf16 slab
        r0, nr, nc = layout_w[name]
        return w_ref[r0:r0 + nr, :nc]

    def V(name):                                    # static slice of f32 slab
        c0, w = layout_v[name]
        return v_ref[:, c0:c0 + w]

    adj_bias = bias_ref[...]                        # [N, N] f32, 0 / -1e30

    def gat_then_linear(z, wg, asrc, adst, wl, beff):
        """GATConv (concat heads) + following nn.Linear, head-concat folded in."""
        xw = jnp.dot(z.astype(bf16), W(wg), preferred_element_type=f32)  # [N,H*C]
        xw_bf = xw.astype(bf16)
        att_src = V(asrc)                                                # [1,H*C]
        prod_dst = xw * V(adst)                      # one VPU multiply, both heads
        aggs = []
        for h in range(heads):                       # heads is tiny & static
            sl = slice(h * hid, (h + 1) * hid)
            a_dst = jnp.sum(prod_dst[:, sl], axis=-1, keepdims=True)     # [N,1]
            # alpha_src as a ROW vector [1, N] (tiny [1,C] x [N,C]^T contraction)
            a_src = lax.dot_general(att_src[:, sl].astype(bf16), xw_bf[:, sl],
                                    (((1,), (1,)), ((), ())),
                                    preferred_element_type=f32)          # [1,N]
            e = _leaky(a_src + a_dst) + adj_bias     # additive mask, no select
            m = jnp.max(e, axis=-1, keepdims=True)
            p = jnp.exp(e - m)                       # masked entries underflow to 0
            attn = p * pl.reciprocal(jnp.sum(p, axis=-1, keepdims=True),
                                     approx=True)
            aggs.append(jnp.dot(attn.astype(bf16), xw_bf[:, sl],
                                preferred_element_type=f32))             # [N,C]
        agg = jnp.concatenate(aggs, axis=-1)         # [N, H*C], one projection:
        return (jnp.dot(agg.astype(bf16), W(wl), preferred_element_type=f32)
                + V(beff))

    # conv0: GATConv -> Linear(H*hid, hid) -> LeakyReLU -> BatchNorm1d(hid)
    z = gat_then_linear(x_ref[...], "w_gat0", "att_src0", "att_dst0",
                        "w_lin0", "b_eff0")
    z = _batchnorm(_leaky(z), V("bn_g0"), V("bn_b0"))                    # [N,hid]

    # conv1: GATConv -> Linear(H*hid,64) -> LReLU -> Linear(64,8) -> LReLU -> BN(8)
    z = gat_then_linear(z, "w_gat1", "att_src1", "att_dst1", "w_lin1", "b_eff1")
    z = _leaky(z)
    z = _leaky(jnp.dot(z.astype(bf16), W("w_lin2"),
                       preferred_element_type=f32) + V("b_lin2"))
    z = _batchnorm(z, V("bn_g1"), V("bn_b1"))                            # [N,8]

    # pooling == 'concat': z.reshape(B, num_nodes*node_dim), expressed as
    #   pooled = pool_m @ ((z @ rep) * node_mask)
    # (exact 0/1 selection; avoids a layout-fragile in-kernel reshape; the
    # constant helpers live inside the packed weight slab -> no extra DMAs).
    zr = (jnp.dot(z.astype(bf16), W("rep"), preferred_element_type=f32)
          * W("nmask").astype(f32))                                      # [N,128]
    pooled = jnp.dot(W("pool"), zr.astype(bf16),
                     preferred_element_type=f32)                         # [8,128]

    # fcn: Linear(->256) LReLU, Linear(->32) LReLU, Linear(->2)
    h = _leaky(jnp.dot(pooled.astype(bf16), W("wf1"),
                       preferred_element_type=f32) + V("b1"))
    h = _leaky(jnp.dot(h.astype(bf16), W("wf2"),
                       preferred_element_type=f32) + V("b2"))
    h = jnp.dot(h.astype(bf16), W("wf3"), preferred_element_type=f32) + V("b3")
    o_ref[...] = h[:batch, :]


# ---------------- full model forward (single fused pallas_call) ---------------
def gat_forward(params, x, adj, *, num_nodes, heads, hidden, node_dim=8):
    n = x.shape[0]
    b = n // num_nodes
    f32 = jnp.float32

    # additive attention mask (reuses the adjacency DMA, removes in-kernel selects)
    adj_bias = jnp.where(adj > 0, 0.0, NEG_INF).astype(f32)

    # tiny constant 0/1 helpers for the 'concat' pooling (packed into the slab)
    i_nodes = jnp.arange(n, dtype=jnp.int32)
    k_cols = jnp.arange(num_nodes * node_dim, dtype=jnp.int32)
    b_pad = ((b + 7) // 8) * 8
    pool_m = jnp.zeros((b_pad, n), f32).at[:b].set(
        (i_nodes[None, :] // num_nodes
         == jnp.arange(b, dtype=jnp.int32)[:, None]).astype(f32))             # [8,N]
    rep = (k_cols[None, :] % node_dim
           == jnp.arange(node_dim, dtype=jnp.int32)[:, None]).astype(f32)     # [nd,nn*nd]
    nmask = (k_cols[None, :] // node_dim
             == (i_nodes % num_nodes)[:, None]).astype(f32)                   # [N,nn*nd]

    p0, p1, f = params["conv0"], params["conv1"], params["fcn"]

    # data-independent bias folds done on the host/wrapper side
    b_eff0 = jnp.dot(p0["b_gat"], p0["w_lin"]) + p0["b_lin"]                  # [1,hid]
    b_eff1 = jnp.dot(p1["b_gat"], p1["w_lin1"]) + p1["b_lin1"]                # [1,64]

    w_pack, layout_w = _pack_matrices([
        ("w_gat0", p0["w_gat"]), ("w_lin0", p0["w_lin"]),
        ("w_gat1", p1["w_gat"]), ("w_lin1", p1["w_lin1"]),
        ("w_lin2", p1["w_lin2"]),
        ("wf1", f["w1"]), ("wf2", f["w2"]), ("wf3", f["w3"]),
        ("pool", pool_m), ("rep", rep), ("nmask", nmask),
    ])
    w_pack = w_pack.astype(jnp.bfloat16)          # bf16 MXU operands (f32 accum)

    v_pack, layout_v = _pack_vectors([
        ("att_src0", p0["att_src"]), ("att_dst0", p0["att_dst"]),
        ("b_eff0", b_eff0), ("bn_g0", p0["bn_g"]), ("bn_b0", p0["bn_b"]),
        ("att_src1", p1["att_src"]), ("att_dst1", p1["att_dst"]),
        ("b_eff1", b_eff1), ("b_lin2", p1["b_lin2"]),
        ("bn_g1", p1["bn_g"]), ("bn_b1", p1["bn_b"]),
        ("b1", f["b1"]), ("b2", f["b2"]), ("b3", f["b3"]),
    ])

    kern = functools.partial(_fused_gat_kernel, heads=heads, hid=hidden,
                             batch=b, layout_w=layout_w, layout_v=layout_v)

    # TODO(synk): at much larger N, row-tile the dense [N,N] logits flash-style
    # and add a "parallel" grid axis over graphs (v7x dual-TC), reducing the
    # BatchNorm batch statistics across shards; at these shapes a single
    # VMEM-resident invocation with 4 input DMAs is optimal.
    return pl.pallas_call(
        kern,
        out_shape=jax.ShapeDtypeStruct((b, 2), f32),
        in_specs=[_vmem_spec()] * 4,
        out_specs=_vmem_spec(),
    )(x, adj_bias, w_pack, v_pack)


# ---------------- deterministic parameter init --------------------------------
def init_params(key, *, input_dim, hidden, heads, num_nodes, node_dim=8):
    keys = iter(jax.random.split(key, 64))

    def nrm(shape, scale=0.1):
        return scale * jax.random.normal(next(keys), shape, dtype=jnp.float32)

    hc = heads * hidden
    params = {
        "conv0": {
            "w_gat": nrm((input_dim, hc)),
            "att_src": nrm((1, hc)),
            "att_dst": nrm((1, hc)),
            "b_gat": nrm((1, hc)),
            "w_lin": nrm((hc, hidden)),
            "b_lin": nrm((1, hidden)),
            "bn_g": 1.0 + nrm((1, hidden)),
            "bn_b": nrm((1, hidden)),
        },
        "conv1": {
            "w_gat": nrm((hidden, hc)),
            "att_src": nrm((1, hc)),
            "att_dst": nrm((1, hc)),
            "b_gat": nrm((1, hc)),
            "w_lin1": nrm((hc, 64)),
            "b_lin1": nrm((1, 64)),
            "w_lin2": nrm((64, node_dim)),
            "b_lin2": nrm((1, node_dim)),
            "bn_g": 1.0 + nrm((1, node_dim)),
            "bn_b": nrm((1, node_dim)),
        },
        "fcn": {
            "w1": nrm((node_dim * num_nodes, 256)),
            "b1": nrm((1, 256)),
            "w2": nrm((256, 32)),
            "b2": nrm((1, 32)),
            "w3": nrm((32, 2)),
            "b3": nrm((1, 2)),
        },
    }
    return params


if __name__ == "__main__":
    key = jax.random.PRNGKey(0)
    k_adj, k_x, k_p = jax.random.split(key, 3)

    B = 2                # number of graphs in the batch
    num_nodes = 16       # nodes per graph
    input_dim = 16       # input node-feature dim
    hidden = 32          # args.hidden_dim
    heads = 2            # args.num_heads
    node_dim = 8         # pooling='concat'
    N = B * num_nodes

    # block-diagonal dense adjacency (random edges + self loops); row i = incoming
    # edges of destination node i (matches PyG softmax over incoming edges).
    rand = jax.random.uniform(k_adj, (B, num_nodes, num_nodes))
    blocks = (rand < 0.3).astype(jnp.float32)
    eye = jnp.eye(num_nodes, dtype=jnp.float32)
    blocks = jnp.maximum(blocks, eye)                 # add_self_loops=True
    adj = jax.scipy.linalg.block_diag(*[blocks[g] for g in range(B)])  # [N, N]

    x = jax.random.normal(k_x, (N, input_dim), dtype=jnp.float32)

    params = init_params(k_p, input_dim=input_dim, hidden=hidden,
                         heads=heads, num_nodes=num_nodes, node_dim=node_dim)

    fwd = jax.jit(functools.partial(gat_forward, num_nodes=num_nodes,
                                    heads=heads, hidden=hidden,
                                    node_dim=node_dim))
    out = jax.block_until_ready(fwd(params, x, adj))

    assert out.shape == (B, 2), out.shape
    assert bool(jnp.all(jnp.isfinite(out)))
    print("KERNEL_OK")
</pallas_src>

<mosaic_0001>
module attributes {stable_mosaic.version = 11 : i64} {
  func.func @_fused_gat_kernel(%arg0: memref<32x16xf32, #tpu.memory_space<vmem>>, %arg1: memref<32x32xf32, #tpu.memory_space<vmem>>, %arg2: memref<704x256xbf16, #tpu.memory_space<vmem>>, %arg3: memref<1x1920xf32, #tpu.memory_space<vmem>>, %arg4: memref<2x2xf32, #tpu.memory_space<vmem>>) attributes {dimension_semantics = [], scalar_prefetch = 0 : i64, scratch_operands = 0 : i64, tpu.core_type = #tpu.core_type<tc>} {
    %c0 = arith.constant 0 : index
    %c0_0 = arith.constant 0 : index
    %0 = vector.load %arg1[%c0, %c0_0] : memref<32x32xf32, #tpu.memory_space<vmem>>, vector<32x32xf32>
    %c0_1 = arith.constant 0 : index
    %c0_2 = arith.constant 0 : index
    %1 = vector.load %arg0[%c0_1, %c0_2] : memref<32x16xf32, #tpu.memory_space<vmem>>, vector<32x16xf32>
    %2 = arith.truncf %1 : vector<32x16xf32> to vector<32x16xbf16>
    %c0_3 = arith.constant 0 : index
    %c0_4 = arith.constant 0 : index
    %3 = vector.load %arg2[%c0_3, %c0_4] : memref<704x256xbf16, #tpu.memory_space<vmem>>, vector<16x64xbf16>
    %cst = arith.constant dense<0.000000e+00> : vector<32x64xf32>
    %4 = tpu.matmul %2, %3, %cst {dimension_numbers = #tpu.dot_dimension_numbers<[1], [0], [0], [1], [0, 0, 1, 1], [], []>} : vector<32x16xbf16>, vector<16x64xbf16>, vector<32x64xf32> -> vector<32x64xf32>
    %5 = arith.truncf %4 : vector<32x64xf32> to vector<32x64xbf16>
    %c0_5 = arith.constant 0 : index
    %c0_6 = arith.constant 0 : index
    %6 = vector.load %arg3[%c0_5, %c0_6] : memref<1x1920xf32, #tpu.memory_space<vmem>>, vector<1x64xf32>
    %c0_7 = arith.constant 0 : index
    %c128 = arith.constant 128 : index
    %7 = vector.load %arg3[%c0_7, %c128] : memref<1x1920xf32, #tpu.memory_space<vmem>>, vector<1x64xf32>
    %8 = vector.broadcast %7 : vector<1x64xf32> to vector<32x64xf32>
    %9 = arith.mulf %4, %8 : vector<32x64xf32>
    %10 = vector.extract_strided_slice %9 {offsets = [0, 0], sizes = [32, 32], strides = [1, 1]} : vector<32x64xf32> to vector<32x32xf32>
    %cst_8 = arith.constant dense<0.000000e+00> : vector<32xf32>
    %11 = vector.multi_reduction <add>, %10, %cst_8 [1] : vector<32x32xf32> to vector<32xf32>
    %12 = vector.shape_cast %11 : vector<32xf32> to vector<32x1xf32>
    %13 = vector.extract_strided_slice %6 {offsets = [0, 0], sizes = [1, 32], strides = [1, 1]} : vector<1x64xf32> to vector<1x32xf32>
    %14 = arith.truncf %13 : vector<1x32xf32> to vector<1x32xbf16>
    %15 = vector.extract_strided_slice %5 {offsets = [0, 0], sizes = [32, 32], strides = [1, 1]} : vector<32x64xbf16> to vector<32x32xbf16>
    %cst_9 = arith.constant dense<0.000000e+00> : vector<1x32xf32>
    %16 = tpu.matmul %14, %15, %cst_9 {dimension_numbers = #tpu.dot_dimension_numbers<[1], [1], [0], [0], [0, 0, 1, 0], [], []>} : vector<1x32xbf16>, vector<32x32xbf16>, vector<1x32xf32> -> vector<1x32xf32>
    %17 = vector.broadcast %16 : vector<1x32xf32> to vector<32x32xf32>
    %18 = vector.broadcast %12 : vector<32x1xf32> to vector<32x32xf32>
    %19 = arith.addf %17, %18 : vector<32x32xf32>
    %cst_10 = arith.constant 0.000000e+00 : f32
    %20 = vector.broadcast %cst_10 : f32 to vector<32x32xf32>
    %21 = arith.cmpf ogt, %19, %20 : vector<32x32xf32>
    %cst_11 = arith.constant 2.000000e-01 : f32
    %22 = vector.broadcast %cst_11 : f32 to vector<32x32xf32>
    %23 = arith.mulf %22, %19 : vector<32x32xf32>
    %24 = arith.select %21, %19, %23 : vector<32x32xi1>, vector<32x32xf32>
    %25 = arith.addf %24, %0 : vector<32x32xf32>
    %cst_12 = arith.constant dense<0xFF800000> : vector<32xf32>
    %26 = vector.multi_reduction <maximumf>, %25, %cst_12 [1] : vector<32x32xf32> to vector<32xf32>
    %27 = vector.shape_cast %26 : vector<32xf32> to vector<32x1xf32>
    %28 = vector.broadcast %27 : vector<32x1xf32> to vector<32x32xf32>
    %29 = arith.subf %25, %28 : vector<32x32xf32>
    %30 = math.exp %29 : vector<32x32xf32>
    %cst_13 = arith.constant dense<0.000000e+00> : vector<32xf32>
    %31 = vector.multi_reduction <add>, %30, %cst_13 [1] : vector<32x32xf32> to vector<32xf32>
    %32 = vector.shape_cast %31 : vector<32xf32> to vector<32x1xf32>
    %33 = tpu.reciprocal %32 {approx = true} : vector<32x1xf32> -> vector<32x1xf32>
    %34 = vector.broadcast %33 : vector<32x1xf32> to vector<32x32xf32>
    %35 = arith.mulf %30, %34 : vector<32x32xf32>
    %36 = arith.truncf %35 : vector<32x32xf32> to vector<32x32xbf16>
    %37 = vector.extract_strided_slice %5 {offsets = [0, 0], sizes = [32, 32], strides = [1, 1]} : vector<32x64xbf16> to vector<32x32xbf16>
    %cst_14 = arith.constant dense<0.000000e+00> : vector<32x32xf32>
    %38 = tpu.matmul %36, %37, %cst_14 {dimension_numbers = #tpu.dot_dimension_numbers<[1], [0], [0], [1], [0, 0, 1, 1], [], []>} : vector<32x32xbf16>, vector<32x32xbf16>, vector<32x32xf32> -> vector<32x32xf32>
    %39 = vector.extract_strided_slice %9 {offsets = [0, 32], sizes = [32, 32], strides = [1, 1]} : vector<32x64xf32> to vector<32x32xf32>
    %cst_15 = arith.constant dense<0.000000e+00> : vector<32xf32>
    %40 = vector.multi_reduction <add>, %39, %cst_15 [1] : vector<32x32xf32> to vector<32xf32>
    %41 = vector.shape_cast %40 : vector<32xf32> to vector<32x1xf32>
    %42 = vector.extract_strided_slice %6 {offsets = [0, 32], sizes = [1, 32], strides = [1, 1]} : vector<1x64xf32> to vector<1x32xf32>
    %43 = arith.truncf %42 : vector<1x32xf32> to vector<1x32xbf16>
    %44 = vector.extract_strided_slice %5 {offsets = [0, 32], sizes = [32, 32], strides = [1, 1]} : vector<32x64xbf16> to vector<32x32xbf16>
    %cst_16 = arith.constant dense<0.000000e+00> : vector<1x32xf32>
    %45 = tpu.matmul %43, %44, %cst_16 {dimension_numbers = #tpu.dot_dimension_numbers<[1], [1], [0], [0], [0, 0, 1, 0], [], []>} : vector<1x32xbf16>, vector<32x32xbf16>, vector<1x32xf32> -> vector<1x32xf32>
    %46 = vector.broadcast %45 : vector<1x32xf32> to vector<32x32xf32>
    %47 = vector.broadcast %41 : vector<32x1xf32> to vector<32x32xf32>
    %48 = arith.addf %46, %47 : vector<32x32xf32>
    %cst_17 = arith.constant 0.000000e+00 : f32
    %49 = vector.broadcast %cst_17 : f32 to vector<32x32xf32>
    %50 = arith.cmpf ogt, %48, %49 : vector<32x32xf32>
    %cst_18 = arith.constant 2.000000e-01 : f32
    %51 = vector.broadcast %cst_18 : f32 to vector<32x32xf32>
    %52 = arith.mulf %51, %48 : vector<32x32xf32>
    %53 = arith.select %50, %48, %52 : vector<32x32xi1>, vector<32x32xf32>
    %54 = arith.addf %53, %0 : vector<32x32xf32>
    %cst_19 = arith.constant dense<0xFF800000> : vector<32xf32>
    %55 = vector.multi_reduction <maximumf>, %54, %cst_19 [1] : vector<32x32xf32> to vector<32xf32>
    %56 = vector.shape_cast %55 : vector<32xf32> to vector<32x1xf32>
    %57 = vector.broadcast %56 : vector<32x1xf32> to vector<32x32xf32>
    %58 = arith.subf %54, %57 : vector<32x32xf32>
    %59 = math.exp %58 : vector<32x32xf32>
    %cst_20 = arith.constant dense<0.000000e+00> : vector<32xf32>
    %60 = vector.multi_reduction <add>, %59, %cst_20 [1] : vector<32x32xf32> to vector<32xf32>
    %61 = vector.shape_cast %60 : vector<32xf32> to vector<32x1xf32>
    %62 = tpu.reciprocal %61 {approx = true} : vector<32x1xf32> -> vector<32x1xf32>
    %63 = vector.broadcast %62 : vector<32x1xf32> to vector<32x32xf32>
    %64 = arith.mulf %59, %63 : vector<32x32xf32>
    %65 = arith.truncf %64 : vector<32x32xf32> to vector<32x32xbf16>
    %66 = vector.extract_strided_slice %5 {offsets = [0, 32], sizes = [32, 32], strides = [1, 1]} : vector<32x64xbf16> to vector<32x32xbf16>
    %cst_21 = arith.constant dense<0.000000e+00> : vector<32x32xf32>
    %67 = tpu.matmul %65, %66, %cst_21 {dimension_numbers = #tpu.dot_dimension_numbers<[1], [0], [0], [1], [0, 0, 1, 1], [], []>} : vector<32x32xbf16>, vector<32x32xbf16>, vector<32x32xf32> -> vector<32x32xf32>
    %68 = tpu.concatenate %38, %67 in 1 : vector<32x32xf32>, vector<32x32xf32> -> vector<32x64xf32>
    %69 = arith.truncf %68 : vector<32x64xf32> to vector<32x64xbf16>
    %c16 = arith.constant 16 : index
    %c0_22 = arith.constant 0 : index
    %70 = vector.load %arg2[%c16, %c0_22] : memref<704x256xbf16, #tpu.memory_space<vmem>>, vector<64x32xbf16>
    %cst_23 = arith.constant dense<0.000000e+00> : vector<32x32xf32>
    %71 = tpu.matmul %69, %70, %cst_23 {dimension_numbers = #tpu.dot_dimension_numbers<[1], [0], [0], [1], [0, 0, 1, 1], [], []>} : vector<32x64xbf16>, vector<64x32xbf16>, vector<32x32xf32> -> vector<32x32xf32>
    %c0_24 = arith.constant 0 : index
    %c256 = arith.constant 256 : index
    %72 = vector.load %arg3[%c0_24, %c256] : memref<1x1920xf32, #tpu.memory_space<vmem>>, vector<1x32xf32>
    %73 = vector.broadcast %72 : vector<1x32xf32> to vector<32x32xf32>
    %74 = arith.addf %71, %73 : vector<32x32xf32>
    %cst_25 = arith.constant 0.000000e+00 : f32
    %75 = vector.broadcast %cst_25 : f32 to vector<32x32xf32>
    %76 = arith.cmpf ogt, %74, %75 : vector<32x32xf32>
    %cst_26 = arith.constant 2.000000e-01 : f32
    %77 = vector.broadcast %cst_26 : f32 to vector<32x32xf32>
    %78 = arith.mulf %77, %74 : vector<32x32xf32>
    %79 = arith.select %76, %74, %78 : vector<32x32xi1>, vector<32x32xf32>
    %c0_27 = arith.constant 0 : index
    %c384 = arith.constant 384 : index
    %80 = vector.load %arg3[%c0_27, %c384] : memref<1x1920xf32, #tpu.memory_space<vmem>>, vector<1x32xf32>
    %c0_28 = arith.constant 0 : index
    %c512 = arith.constant 512 : index
    %81 = vector.load %arg3[%c0_28, %c512] : memref<1x1920xf32, #tpu.memory_space<vmem>>, vector<1x32xf32>
    %cst_29 = arith.constant dense<0.000000e+00> : vector<32xf32>
    %82 = vector.multi_reduction <add>, %79, %cst_29 [0] : vector<32x32xf32> to vector<32xf32>
    %83 = vector.shape_cast %82 : vector<32xf32> to vector<1x32xf32>
    %cst_30 = arith.constant 3.125000e-02 : f32
    %84 = vector.broadcast %cst_30 : f32 to vector<1x32xf32>
    %85 = arith.mulf %83, %84 : vector<1x32xf32>
    %86 = vector.broadcast %85 : vector<1x32xf32> to vector<32x32xf32>
    %87 = arith.subf %79, %86 : vector<32x32xf32>
    %88 = arith.mulf %87, %87 : vector<32x32xf32>
    %cst_31 = arith.constant dense<0.000000e+00> : vector<32xf32>
    %89 = vector.multi_reduction <add>, %88, %cst_31 [0] : vector<32x32xf32> to vector<32xf32>
    %90 = vector.shape_cast %89 : vector<32xf32> to vector<1x32xf32>
    %cst_32 = arith.constant 3.125000e-02 : f32
    %91 = vector.broadcast %cst_32 : f32 to vector<1x32xf32>
    %92 = arith.mulf %90, %91 : vector<1x32xf32>
    %cst_33 = arith.constant 9.99999974E-6 : f32
    %93 = vector.broadcast %cst_33 : f32 to vector<1x32xf32>
    %94 = arith.addf %92, %93 : vector<1x32xf32>
    %95 = math.rsqrt %94 : vector<1x32xf32>
    %96 = vector.broadcast %95 : vector<1x32xf32> to vector<32x32xf32>
    %97 = arith.mulf %87, %96 : vector<32x32xf32>
    %98 = vector.broadcast %80 : vector<1x32xf32> to vector<32x32xf32>
    %99 = arith.mulf %97, %98 : vector<32x32xf32>
    %100 = vector.broadcast %81 : vector<1x32xf32> to vector<32x32xf32>
    %101 = arith.addf %99, %100 : vector<32x32xf32>
    %102 = arith.truncf %101 : vector<32x32xf32> to vector<32x32xbf16>
    %c80 = arith.constant 80 : index
    %c0_34 = arith.constant 0 : index
    %103 = vector.load %arg2[%c80, %c0_34] : memref<704x256xbf16, #tpu.memory_space<vmem>>, vector<32x64xbf16>
    %cst_35 = arith.constant dense<0.000000e+00> : vector<32x64xf32>
    %104 = tpu.matmul %102, %103, %cst_35 {dimension_numbers = #tpu.dot_dimension_numbers<[1], [0], [0], [1], [0, 0, 1, 1], [], []>} : vector<32x32xbf16>, vector<32x64xbf16>, vector<32x64xf32> -> vector<32x64xf32>
    %105 = arith.truncf %104 : vector<32x64xf32> to vector<32x64xbf16>
    %c0_36 = arith.constant 0 : index
    %c640 = arith.constant 640 : index
    %106 = vector.load %arg3[%c0_36, %c640] : memref<1x1920xf32, #tpu.memory_space<vmem>>, vector<1x64xf32>
    %c0_37 = arith.constant 0 : index
    %c768 = arith.constant 768 : index
    %107 = vector.load %arg3[%c0_37, %c768] : memref<1x1920xf32, #tpu.memory_space<vmem>>, vector<1x64xf32>
    %108 = vector.broadcast %107 : vector<1x64xf32> to vector<32x64xf32>
    %109 = arith.mulf %104, %108 : vector<32x64xf32>
    %110 = vector.extract_strided_slice %109 {offsets = [0, 0], sizes = [32, 32], strides = [1, 1]} : vector<32x64xf32> to vector<32x32xf32>
    %cst_38 = arith.constant dense<0.000000e+00> : vector<32xf32>
    %111 = vector.multi_reduction <add>, %110, %cst_38 [1] : vector<32x32xf32> to vector<32xf32>
    %112 = vector.shape_cast %111 : vector<32xf32> to vector<32x1xf32>
    %113 = vector.extract_strided_slice %106 {offsets = [0, 0], sizes = [1, 32], strides = [1, 1]} : vector<1x64xf32> to vector<1x32xf32>
    %114 = arith.truncf %113 : vector<1x32xf32> to vector<1x32xbf16>
    %115 = vector.extract_strided_slice %105 {offsets = [0, 0], sizes = [32, 32], strides = [1, 1]} : vector<32x64xbf16> to vector<32x32xbf16>
    %cst_39 = arith.constant dense<0.000000e+00> : vector<1x32xf32>
    %116 = tpu.matmul %114, %115, %cst_39 {dimension_numbers = #tpu.dot_dimension_numbers<[1], [1], [0], [0], [0, 0, 1, 0], [], []>} : vector<1x32xbf16>, vector<32x32xbf16>, vector<1x32xf32> -> vector<1x32xf32>
    %117 = vector.broadcast %116 : vector<1x32xf32> to vector<32x32xf32>
    %118 = vector.broadcast %112 : vector<32x1xf32> to vector<32x32xf32>
    %119 = arith.addf %117, %118 : vector<32x32xf32>
    %cst_40 = arith.constant 0.000000e+00 : f32
    %120 = vector.broadcast %cst_40 : f32 to vector<32x32xf32>
    %121 = arith.cmpf ogt, %119, %120 : vector<32x32xf32>
    %cst_41 = arith.constant 2.000000e-01 : f32
    %122 = vector.broadcast %cst_41 : f32 to vector<32x32xf32>
    %123 = arith.mulf %122, %119 : vector<32x32xf32>
    %124 = arith.select %121, %119, %123 : vector<32x32xi1>, vector<32x32xf32>
    %125 = arith.addf %124, %0 : vector<32x32xf32>
    %cst_42 = arith.constant dense<0xFF800000> : vector<32xf32>
    %126 = vector.multi_reduction <maximumf>, %125, %cst_42 [1] : vector<32x32xf32> to vector<32xf32>
    %127 = vector.shape_cast %126 : vector<32xf32> to vector<32x1xf32>
    %128 = vector.broadcast %127 : vector<32x1xf32> to vector<32x32xf32>
    %129 = arith.subf %125, %128 : vector<32x32xf32>
    %130 = math.exp %129 : vector<32x32xf32>
    %cst_43 = arith.constant dense<0.000000e+00> : vector<32xf32>
    %131 = vector.multi_reduction <add>, %130, %cst_43 [1] : vector<32x32xf32> to vector<32xf32>
    %132 = vector.shape_cast %131 : vector<32xf32> to vector<32x1xf32>
    %133 = tpu.reciprocal %132 {approx = true} : vector<32x1xf32> -> vector<32x1xf32>
    %134 = vector.broadcast %133 : vector<32x1xf32> to vector<32x32xf32>
    %135 = arith.mulf %130, %134 : vector<32x32xf32>
    %136 = arith.truncf %135 : vector<32x32xf32> to vector<32x32xbf16>
    %137 = vector.extract_strided_slice %105 {offsets = [0, 0], sizes = [32, 32], strides = [1, 1]} : vector<32x64xbf16> to vector<32x32xbf16>
    %cst_44 = arith.constant dense<0.000000e+00> : vector<32x32xf32>
    %138 = tpu.matmul %136, %137, %cst_44 {dimension_numbers = #tpu.dot_dimension_numbers<[1], [0], [0], [1], [0, 0, 1, 1], [], []>} : vector<32x32xbf16>, vector<32x32xbf16>, vector<32x32xf32> -> vector<32x32xf32>
    %139 = vector.extract_strided_slice %109 {offsets = [0, 32], sizes = [32, 32], strides = [1, 1]} : vector<32x64xf32> to vector<32x32xf32>
    %cst_45 = arith.constant dense<0.000000e+00> : vector<32xf32>
    %140 = vector.multi_reduction <add>, %139, %cst_45 [1] : vector<32x32xf32> to vector<32xf32>
    %141 = vector.shape_cast %140 : vector<32xf32> to vector<32x1xf32>
    %142 = vector.extract_strided_slice %106 {offsets = [0, 32], sizes = [1, 32], strides = [1, 1]} : vector<1x64xf32> to vector<1x32xf32>
    %143 = arith.truncf %142 : vector<1x32xf32> to vector<1x32xbf16>
    %144 = vector.extract_strided_slice %105 {offsets = [0, 32], sizes = [32, 32], strides = [1, 1]} : vector<32x64xbf16> to vector<32x32xbf16>
    %cst_46 = arith.constant dense<0.000000e+00> : vector<1x32xf32>
    %145 = tpu.matmul %143, %144, %cst_46 {dimension_numbers = #tpu.dot_dimension_numbers<[1], [1], [0], [0], [0, 0, 1, 0], [], []>} : vector<1x32xbf16>, vector<32x32xbf16>, vector<1x32xf32> -> vector<1x32xf32>
    %146 = vector.broadcast %145 : vector<1x32xf32> to vector<32x32xf32>
    %147 = vector.broadcast %141 : vector<32x1xf32> to vector<32x32xf32>
    %148 = arith.addf %146, %147 : vector<32x32xf32>
    %cst_47 = arith.constant 0.000000e+00 : f32
    %149 = vector.broadcast %cst_47 : f32 to vector<32x32xf32>
    %150 = arith.cmpf ogt, %148, %149 : vector<32x32xf32>
    %cst_48 = arith.constant 2.000000e-01 : f32
    %151 = vector.broadcast %cst_48 : f32 to vector<32x32xf32>
    %152 = arith.mulf %151, %148 : vector<32x32xf32>
    %153 = arith.select %150, %148, %152 : vector<32x32xi1>, vector<32x32xf32>
    %154 = arith.addf %153, %0 : vector<32x32xf32>
    %cst_49 = arith.constant dense<0xFF800000> : vector<32xf32>
    %155 = vector.multi_reduction <maximumf>, %154, %cst_49 [1] : vector<32x32xf32> to vector<32xf32>
    %156 = vector.shape_cast %155 : vector<32xf32> to vector<32x1xf32>
    %157 = vector.broadcast %156 : vector<32x1xf32> to vector<32x32xf32>
    %158 = arith.subf %154, %157 : vector<32x32xf32>
    %159 = math.exp %158 : vector<32x32xf32>
    %cst_50 = arith.constant dense<0.000000e+00> : vector<32xf32>
    %160 = vector.multi_reduction <add>, %159, %cst_50 [1] : vector<32x32xf32> to vector<32xf32>
    %161 = vector.shape_cast %160 : vector<32xf32> to vector<32x1xf32>
    %162 = tpu.reciprocal %161 {approx = true} : vector<32x1xf32> -> vector<32x1xf32>
    %163 = vector.broadcast %162 : vector<32x1xf32> to vector<32x32xf32>
    %164 = arith.mulf %159, %163 : vector<32x32xf32>
    %165 = arith.truncf %164 : vector<32x32xf32> to vector<32x32xbf16>
    %166 = vector.extract_strided_slice %105 {offsets = [0, 32], sizes = [32, 32], strides = [1, 1]} : vector<32x64xbf16> to vector<32x32xbf16>
    %cst_51 = arith.constant dense<0.000000e+00> : vector<32x32xf32>
    %167 = tpu.matmul %165, %166, %cst_51 {dimension_numbers = #tpu.dot_dimension_numbers<[1], [0], [0], [1], [0, 0, 1, 1], [], []>} : vector<32x32xbf16>, vector<32x32xbf16>, vector<32x32xf32> -> vector<32x32xf32>
    %168 = tpu.concatenate %138, %167 in 1 : vector<32x32xf32>, vector<32x32xf32> -> vector<32x64xf32>
    %169 = arith.truncf %168 : vector<32x64xf32> to vector<32x64xbf16>
    %c112 = arith.constant 112 : index
    %c0_52 = arith.constant 0 : index
    %170 = vector.load %arg2[%c112, %c0_52] : memref<704x256xbf16, #tpu.memory_space<vmem>>, vector<64x64xbf16>
    %cst_53 = arith.constant dense<0.000000e+00> : vector<32x64xf32>
    %171 = tpu.matmul %169, %170, %cst_53 {dimension_numbers = #tpu.dot_dimension_numbers<[1], [0], [0], [1], [0, 0, 1, 1], [], []>} : vector<32x64xbf16>, vector<64x64xbf16>, vector<32x64xf32> -> vector<32x64xf32>
    %c0_54 = arith.constant 0 : index
    %c896 = arith.constant 896 : index
    %172 = vector.load %arg3[%c0_54, %c896] : memref<1x1920xf32, #tpu.memory_space<vmem>>, vector<1x64xf32>
    %173 = vector.broadcast %172 : vector<1x64xf32> to vector<32x64xf32>
    %174 = arith.addf %171, %173 : vector<32x64xf32>
    %cst_55 = arith.constant 0.000000e+00 : f32
    %175 = vector.broadcast %cst_55 : f32 to vector<32x64xf32>
    %176 = arith.cmpf ogt, %174, %175 : vector<32x64xf32>
    %cst_56 = arith.constant 2.000000e-01 : f32
    %177 = vector.broadcast %cst_56 : f32 to vector<32x64xf32>
    %178 = arith.mulf %177, %174 : vector<32x64xf32>
    %179 = arith.select %176, %174, %178 : vector<32x64xi1>, vector<32x64xf32>
    %180 = arith.truncf %179 : vector<32x64xf32> to vector<32x64xbf16>
    %c176 = arith.constant 176 : index
    %c0_57 = arith.constant 0 : index
    %181 = vector.load %arg2[%c176, %c0_57] : memref<704x256xbf16, #tpu.memory_space<vmem>>, vector<64x8xbf16>
    %cst_58 = arith.constant dense<0.000000e+00> : vector<32x8xf32>
    %182 = tpu.matmul %180, %181, %cst_58 {dimension_numbers = #tpu.dot_dimension_numbers<[1], [0], [0], [1], [0, 0, 1, 1], [], []>} : vector<32x64xbf16>, vector<64x8xbf16>, vector<32x8xf32> -> vector<32x8xf32>
    %c0_59 = arith.constant 0 : index
    %c1024 = arith.constant 1024 : index
    %183 = vector.load %arg3[%c0_59, %c1024] : memref<1x1920xf32, #tpu.memory_space<vmem>>, vector<1x8xf32>
    %184 = vector.broadcast %183 : vector<1x8xf32> to vector<32x8xf32>
    %185 = arith.addf %182, %184 : vector<32x8xf32>
    %cst_60 = arith.constant 0.000000e+00 : f32
    %186 = vector.broadcast %cst_60 : f32 to vector<32x8xf32>
    %187 = arith.cmpf ogt, %185, %186 : vector<32x8xf32>
    %cst_61 = arith.constant 2.000000e-01 : f32
    %188 = vector.broadcast %cst_61 : f32 to vector<32x8xf32>
    %189 = arith.mulf %188, %185 : vector<32x8xf32>
    %190 = arith.select %187, %185, %189 : vector<32x8xi1>, vector<32x8xf32>
    %c0_62 = arith.constant 0 : index
    %c1152 = arith.constant 1152 : index
    %191 = vector.load %arg3[%c0_62, %c1152] : memref<1x1920xf32, #tpu.memory_space<vmem>>, vector<1x8xf32>
    %c0_63 = arith.constant 0 : index
    %c1280 = arith.constant 1280 : index
    %192 = vector.load %arg3[%c0_63, %c1280] : memref<1x1920xf32, #tpu.memory_space<vmem>>, vector<1x8xf32>
    %cst_64 = arith.constant dense<0.000000e+00> : vector<8xf32>
    %193 = vector.multi_reduction <add>, %190, %cst_64 [0] : vector<32x8xf32> to vector<8xf32>
    %194 = vector.shape_cast %193 : vector<8xf32> to vector<1x8xf32>
    %cst_65 = arith.constant 3.125000e-02 : f32
    %195 = vector.broadcast %cst_65 : f32 to vector<1x8xf32>
    %196 = arith.mulf %194, %195 : vector<1x8xf32>
    %197 = vector.broadcast %196 : vector<1x8xf32> to vector<32x8xf32>
    %198 = arith.subf %190, %197 : vector<32x8xf32>
    %199 = arith.mulf %198, %198 : vector<32x8xf32>
    %cst_66 = arith.constant dense<0.000000e+00> : vector<8xf32>
    %200 = vector.multi_reduction <add>, %199, %cst_66 [0] : vector<32x8xf32> to vector<8xf32>
    %201 = vector.shape_cast %200 : vector<8xf32> to vector<1x8xf32>
    %cst_67 = arith.constant 3.125000e-02 : f32
    %202 = vector.broadcast %cst_67 : f32 to vector<1x8xf32>
    %203 = arith.mulf %201, %202 : vector<1x8xf32>
    %cst_68 = arith.constant 9.99999974E-6 : f32
    %204 = vector.broadcast %cst_68 : f32 to vector<1x8xf32>
    %205 = arith.addf %203, %204 : vector<1x8xf32>
    %206 = math.rsqrt %205 : vector<1x8xf32>
    %207 = vector.broadcast %206 : vector<1x8xf32> to vector<32x8xf32>
    %208 = arith.mulf %198, %207 : vector<32x8xf32>
    %209 = vector.broadcast %191 : vector<1x8xf32> to vector<32x8xf32>
    %210 = arith.mulf %208, %209 : vector<32x8xf32>
    %211 = vector.broadcast %192 : vector<1x8xf32> to vector<32x8xf32>
    %212 = arith.addf %210, %211 : vector<32x8xf32>
    %213 = arith.truncf %212 : vector<32x8xf32> to vector<32x8xbf16>
    %c664 = arith.constant 664 : index
    %c0_69 = arith.constant 0 : index
    %214 = vector.load %arg2[%c664, %c0_69] : memref<704x256xbf16, #tpu.memory_space<vmem>>, vector<8x128xbf16>
    %cst_70 = arith.constant dense<0.000000e+00> : vector<32x128xf32>
    %215 = tpu.matmul %213, %214, %cst_70 {dimension_numbers = #tpu.dot_dimension_numbers<[1], [0], [0], [1], [0, 0, 1, 1], [], []>} : vector<32x8xbf16>, vector<8x128xbf16>, vector<32x128xf32> -> vector<32x128xf32>
    %c672 = arith.constant 672 : index
    %c0_71 = arith.constant 0 : index
    %216 = vector.load %arg2[%c672, %c0_71] : memref<704x256xbf16, #tpu.memory_space<vmem>>, vector<32x128xbf16>
    %217 = arith.extf %216 : vector<32x128xbf16> to vector<32x128xf32>
    %218 = arith.mulf %215, %217 : vector<32x128xf32>
    %c656 = arith.constant 656 : index
    %c0_72 = arith.constant 0 : index
    %219 = vector.load %arg2[%c656, %c0_72] : memref<704x256xbf16, #tpu.memory_space<vmem>>, vector<8x32xbf16>
    %220 = arith.truncf %218 : vector<32x128xf32> to vector<32x128xbf16>
    %cst_73 = arith.constant dense<0.000000e+00> : vector<8x128xf32>
    %221 = tpu.matmul %219, %220, %cst_73 {dimension_numbers = #tpu.dot_dimension_numbers<[1], [0], [0], [1], [0, 0, 1, 1], [], []>} : vector<8x32xbf16>, vector<32x128xbf16>, vector<8x128xf32> -> vector<8x128xf32>
    %222 = arith.truncf %221 : vector<8x128xf32> to vector<8x128xbf16>
    %c240 = arith.constant 240 : index
    %c0_74 = arith.constant 0 : index
    %223 = vector.load %arg2[%c240, %c0_74] : memref<704x256xbf16, #tpu.memory_space<vmem>>, vector<128x256xbf16>
    %cst_75 = arith.constant dense<0.000000e+00> : vector<8x256xf32>
    %224 = tpu.matmul %222, %223, %cst_75 {dimension_numbers = #tpu.dot_dimension_numbers<[1], [0], [0], [1], [0, 0, 1, 1], [], []>} : vector<8x128xbf16>, vector<128x256xbf16>, vector<8x256xf32> -> vector<8x256xf32>
    %c0_76 = arith.constant 0 : index
    %c1408 = arith.constant 1408 : index
    %225 = vector.load %arg3[%c0_76, %c1408] : memref<1x1920xf32, #tpu.memory_space<vmem>>, vector<1x256xf32>
    %226 = vector.broadcast %225 : vector<1x256xf32> to vector<8x256xf32>
    %227 = arith.addf %224, %226 : vector<8x256xf32>
    %cst_77 = arith.constant 0.000000e+00 : f32
    %228 = vector.broadcast %cst_77 : f32 to vector<8x256xf32>
    %229 = arith.cmpf ogt, %227, %228 : vector<8x256xf32>
    %cst_78 = arith.constant 2.000000e-01 : f32
    %230 = vector.broadcast %cst_78 : f32 to vector<8x256xf32>
    %231 = arith.mulf %230, %227 : vector<8x256xf32>
    %232 = arith.select %229, %227, %231 : vector<8x256xi1>, vector<8x256xf32>
    %233 = arith.truncf %232 : vector<8x256xf32> to vector<8x256xbf16>
    %c368 = arith.constant 368 : index
    %c0_79 = arith.constant 0 : index
    %234 = vector.load %arg2[%c368, %c0_79] : memref<704x256xbf16, #tpu.memory_space<vmem>>, vector<256x32xbf16>
    %cst_80 = arith.constant dense<0.000000e+00> : vector<8x32xf32>
    %235 = tpu.matmul %233, %234, %cst_80 {dimension_numbers = #tpu.dot_dimension_numbers<[1], [0], [0], [1], [0, 0, 1, 1], [], []>} : vector<8x256xbf16>, vector<256x32xbf16>, vector<8x32xf32> -> vector<8x32xf32>
    %c0_81 = arith.constant 0 : index
    %c1664 = arith.constant 1664 : index
    %236 = vector.load %arg3[%c0_81, %c1664] : memref<1x1920xf32, #tpu.memory_space<vmem>>, vector<1x32xf32>
    %237 = vector.broadcast %236 : vector<1x32xf32> to vector<8x32xf32>
    %238 = arith.addf %235, %237 : vector<8x32xf32>
    %cst_82 = arith.constant 0.000000e+00 : f32
    %239 = vector.broadcast %cst_82 : f32 to vector<8x32xf32>
    %240 = arith.cmpf ogt, %238, %239 : vector<8x32xf32>
    %cst_83 = arith.constant 2.000000e-01 : f32
    %241 = vector.broadcast %cst_83 : f32 to vector<8x32xf32>
    %242 = arith.mulf %241, %238 : vector<8x32xf32>
    %243 = arith.select %240, %238, %242 : vector<8x32xi1>, vector<8x32xf32>
    %244 = arith.truncf %243 : vector<8x32xf32> to vector<8x32xbf16>
    %c624 = arith.constant 624 : index
    %c0_84 = arith.constant 0 : index
    %245 = vector.load %arg2[%c624, %c0_84] : memref<704x256xbf16, #tpu.memory_space<vmem>>, vector<32x2xbf16>
    %cst_85 = arith.constant dense<0.000000e+00> : vector<8x2xf32>
    %246 = tpu.matmul %244, %245, %cst_85 {dimension_numbers = #tpu.dot_dimension_numbers<[1], [0], [0], [1], [0, 0, 1, 1], [], []>} : vector<8x32xbf16>, vector<32x2xbf16>, vector<8x2xf32> -> vector<8x2xf32>
    %c0_86 = arith.constant 0 : index
    %c1792 = arith.constant 1792 : index
    %247 = vector.load %arg3[%c0_86, %c1792] : memref<1x1920xf32, #tpu.memory_space<vmem>>, vector<1x2xf32>
    %248 = vector.broadcast %247 : vector<1x2xf32> to vector<8x2xf32>
    %249 = arith.addf %246, %248 : vector<8x2xf32>
    %250 = vector.extract_strided_slice %249 {offsets = [0, 0], sizes = [2, 2], strides = [1, 1]} : vector<8x2xf32> to vector<2x2xf32>
    %c0_87 = arith.constant 0 : index
    %c0_88 = arith.constant 0 : index
    %251 = vector.load %arg4[%c0_87, %c0_88] : memref<2x2xf32, #tpu.memory_space<vmem>>, vector<2x2xf32>
    tpu.vector_store %arg4[%c0_87, %c0_88], %250 {strides = array<i32>} : memref<2x2xf32, #tpu.memory_space<vmem>>, vector<2x2xf32>,
    return
  }
}

</mosaic_0001>

<llo_original>
// kernel: gat_forward.1
$region0: #{gat_forward.1}
  #allocation0 [shape = 'u32[]', space=smem, size = 0x4, offset = 0x4, fixed_abs, tag = 'smem constant byte address 0x4 - core index']
  #allocation1 [shape = 'u32[144,128]{1,0:T(1,128)}', space=vmem, size = 0x12000, scoped, tag = 'internal scratch']
  %s0 = inlined_call_operand.vmem [shape: f32[32,16], index: 0, kind: input, shape index: {}]
  %s1 = inlined_call_operand.vmem [shape: f32[32,32], index: 1, kind: input, shape index: {}]
  %s2 = inlined_call_operand.vmem [shape: bf16[704,256], index: 2, kind: input, shape index: {}]
  %s3 = inlined_call_operand.vmem [shape: f32[1,1920], index: 3, kind: input, shape index: {}]
  %s4 = inlined_call_operand.hbm [shape: f32[2,2], index: 4, kind: output, shape index: {}]
  %s5 = sld [smem:[#allocation0]]
  $region26: #{gat_forward.1} parent=0
    _
  %s7 = ssub.s32 1, %s5
  %s8 = scalar_select 0, %s7, %s5
  $region1: #{gat_forward.1} parent=0
    #allocation2 [shape = 'u8[1024]{0}', space=vmem, size = 0x400, scoped, tag = 'output window, operand 0, single buffered']
    #allocation3 [shape = 's32[1]{0}', space=sflag, size = 0x4, scoped, tag = 'scoped memory for gat_forward.1']
    %9 = vsyncpa [#allocation3], 0
    // Predicated region
    $region2: #{gat_forward.1} parent=1 // pred_check
      _
    $region3: #{gat_forward.1} parent=1 // pred_check_branch
      %11 = sbr.rel (0) target = $region5
    $region4: #{gat_forward.1} parent=1 // pred_region
      _
    $region5: #{gat_forward.1} parent=1 // pred_fallthru
      _
    // Predicated region
    $region6: #{gat_forward.1} parent=1 // pred_check
      _
    $region7: #{gat_forward.1} parent=1 // pred_check_branch
      %13 = sbr.rel (0) target = $region9
    $region8: #{gat_forward.1} parent=1 // pred_region
      _
    $region9: #{gat_forward.1} parent=1 // pred_fallthru
      _
    // Predicated region
    $region10: #{gat_forward.1} parent=1 // pred_check
      _
    $region11: #{gat_forward.1} parent=1 // pred_check_branch
      %15 = sbr.rel (0) target = $region13
    $region12: #{gat_forward.1} parent=1 // pred_region
      _
    $region13: #{gat_forward.1} parent=1 // pred_fallthru
      _
    // Predicated region
    $region14: #{gat_forward.1} parent=1 // pred_check
      _
    $region15: #{gat_forward.1} parent=1 // pred_check_branch
      %17 = sbr.rel (0) target = $region17
    $region16: #{gat_forward.1} parent=1 // pred_region
      _
    $region17: #{gat_forward.1} parent=1 // pred_fallthru
      _
    %v19 = vld [vmem:[%s1] sm:$0xff]
    %v20 = vld [vmem:[%s1 + $0x8] sm:$0xff]
    %v21 = vld [vmem:[%s1 + $0x10] sm:$0xff]
    %v22 = vld [vmem:[%s1 + $0x18] sm:$0xff]
    %v23 = vld [vmem:[%s0] sm:$0xff]
    %v24 = vld [vmem:[%s0 + $0x8] sm:$0xff]
    %v25 = vld [vmem:[%s0 + $0x10] sm:$0xff]
    %v26 = vld [vmem:[%s0 + $0x18] sm:$0xff]
    %v27 = vpack.c.bf16 %v24, %v23
    %v28 = vpack.c.bf16 %v26, %v25
    %v29 = vld [vmem:[%s2] sm:$0xf]
    %v30 = vld [vmem:[%s2 + $0x8] sm:$0xf]
    %v33 = vunpack.c.l.b16 %v29
    %v34 = vunpack.c.l.b16 %v30
    %v35 = vpack.c.b16 %v34, %v33
    %vm37 = vcmask 130048
    %v39 = vsel %vm37, %v27, 0
    %v42 = vsel %vm37, %v28, 0
    %44 = vmatprep.subr.bf16.mxu0 0
    %45 = vmatpush1.bf16.msra.mxu0 0
    %46 = vmatprep.subr.bf16.mxu0 0
    %47 = vmatpush1.bf16.msra.mxu0 0
    %48 = vmatprep.subr.bf16.mxu0 0
    %49 = vmatpush1.bf16.msra.mxu0 0
    %50 = vmatprep.subr.bf16.mxu0 0
    %51 = vmatpush1.bf16.msra.mxu0 0
    %52 = vmatprep.subr.bf16.mxu0 0
    %53 = vmatpush1.bf16.msra.mxu0 0
    %54 = vmatprep.subr.bf16.mxu0 0
    %55 = vmatpush1.bf16.msra.mxu0 0
    %56 = vmatprep.subr.bf16.mxu0 0
    %57 = vmatpush1.bf16.msra.mxu0 0
    %58 = vmatprep.subr.bf16.mxu0 0
    %59 = vmatpush1.bf16.msra.mxu0 %v35
    %60 = vmatprep.subr.bf16.mxu0 0
    %61 = vmatpush2.bf16.msra.mxu0 0
    %62 = vmatprep.subr.bf16.mxu0 0
    %63 = vmatpush2.bf16.msra.mxu0 0
    %64 = vmatprep.subr.bf16.mxu0 0
    %65 = vmatpush2.bf16.msra.mxu0 0
    %66 = vmatprep.subr.bf16.mxu0 0
    %67 = vmatpush2.bf16.msra.mxu0 0
    %68 = vmatprep.subr.bf16.mxu0 0
    %69 = vmatpush2.bf16.msra.mxu0 0
    %70 = vmatprep.subr.bf16.mxu0 0
    %71 = vmatpush2.bf16.msra.mxu0 0
    %72 = vmatprep.subr.bf16.mxu0 0
    %73 = vmatpush2.bf16.msra.mxu0 0
    %74 = vmatprep.subr.bf16.mxu0 0
    %75 = vmatpush2.bf16.msra.mxu0 0
    %76 = vmatprep.mubr.bf16.mxu0 0
    %77 = vmatmul.mubr.bf16.gmra.mxu0 %v39
    %v78 = vpop.f32.mrf.mxu0
    %v79 = vadd.f32 0.0, %v78
    %v80 = vpop.f32.mrf.mxu0
    %v81 = vpop.f32.mrf.mxu0
    %v82 = vadd.f32 0.0, %v81
    %v83 = vpop.f32.mrf.mxu0
    %84 = vmatprep.mubr.bf16.mxu0 0
    %85 = vmatmul.mubr.bf16.gmra.mxu0 %v42
    %v86 = vpop.f32.mrf.mxu0
    %v87 = vadd.f32 0.0, %v86
    %v88 = vpop.f32.mrf.mxu0
    %v89 = vpop.f32.mrf.mxu0
    %v90 = vadd.f32 0.0, %v89
    %v91 = vpop.f32.mrf.mxu0
    %92 = vdwg.mxu0
    %v93 = vpack.c.bf16 %v82, %v79
    %v94 = vpack.c.bf16 %v90, %v87
    %v95 = vld [vmem:[%s3] sm:$0x1]
    %v96 = vld [vmem:[%s3 + $0x1] sm:$0x1]
    %v98 = vlaneseq
    %v99 = vshrl.u32 %v98, 7
    %v100 = vsub.s32 0, %v99
    %v101 = vrot.slane %v96, %v100
    %v103 = vmul.f32 %v79, %v101
    %v104 = vmul.f32 %v82, %v101
    %v105 = vmul.f32 %v87, %v101
    %v106 = vmul.f32 %v90, %v101
    %vm107 = vcmask 261120
    %v108 = vsel %vm107, %v103, 0.0
    %109 = vadd.xlane.f32.xlu0 %v108
    %v110 = vpop.xlane.xlu0 %109
    %v111 = vsel %vm107, %v104, 0.0
    %112 = vadd.xlane.f32.xlu0 %v111
    %v113 = vpop.xlane.xlu0 %112
    %v114 = vsel %vm107, %v105, 0.0
    %115 = vadd.xlane.f32.xlu0 %v114
    %v116 = vpop.xlane.xlu0 %115
    %v117 = vsel %vm107, %v106, 0.0
    %118 = vadd.xlane.f32.xlu0 %v117
    %v119 = vpop.xlane.xlu0 %118
    %v120 = vpack.c.bf16 %v95, %v95
    %v122 = vsel %vm107, %v120, 0
    %v125 = vsel %vm107, %v93, 0
    %v128 = vsel %vm107, %v94, 0
    %130 = vmatprep.subr.bf16.mxu0 0
    %131 = vmatpush1.bf16.xpose.msra.mxu0 0
    %132 = vmatprep.subr.bf16.mxu0 0
    %133 = vmatpush1.bf16.xpose.msra.mxu0 0
    %134 = vmatprep.subr.bf16.mxu0 0
    %135 = vmatpush1.bf16.xpose.msra.mxu0 0
    %136 = vmatprep.subr.bf16.mxu0 0
    %137 = vmatpush1.bf16.xpose.msra.mxu0 0
    %138 = vmatprep.subr.bf16.mxu0 0
    %139 = vmatpush1.bf16.xpose.msra.mxu0 0
    %140 = vmatprep.subr.bf16.mxu0 0
    %141 = vmatpush1.bf16.xpose.msra.mxu0 0
    %142 = vmatprep.subr.bf16.mxu0 0
    %143 = vmatpush1.bf16.xpose.msra.mxu0 %v128
    %144 = vmatprep.subr.bf16.mxu0 0
    %145 = vmatpush1.bf16.xpose.msra.mxu0 %v125
    %146 = vmatprep.subr.bf16.mxu0 0
    %147 = vmatpush2.bf16.xpose.msra.mxu0 0
    %148 = vmatprep.subr.bf16.mxu0 0
    %149 = vmatpush2.bf16.xpose.msra.mxu0 0
    %150 = vmatprep.subr.bf16.mxu0 0
    %151 = vmatpush2.bf16.xpose.msra.mxu0 0
    %152 = vmatprep.subr.bf16.mxu0 0
    %153 = vmatpush2.bf16.xpose.msra.mxu0 0
    %154 = vmatprep.subr.bf16.mxu0 0
    %155 = vmatpush2.bf16.xpose.msra.mxu0 0
    %156 = vmatprep.subr.bf16.mxu0 0
    %157 = vmatpush2.bf16.xpose.msra.mxu0 0
    %158 = vmatprep.subr.bf16.mxu0 0
    %159 = vmatpush2.bf16.xpose.msra.mxu0 0
    %160 = vmatprep.subr.bf16.mxu0 0
    %161 = vmatpush2.bf16.xpose.msra.mxu0 0
    %162 = vmatprep.mubr.bf16.mxu0 0
    %163 = vmatmul.mubr.bf16.gmra.mxu0 %v122
    %v164 = vpop.f32.mrf.mxu0
    %v165 = vadd.f32 0.0, %v164
    %v166 = vpop.f32.mrf.mxu0
    %v167 = vpop.f32.mrf.mxu0
    %v168 = vpop.f32.mrf.mxu0
    %169 = vdwg.mxu0
    %v170 = vlaneseq
    %v171 = vshrl.u32 %v170, 7
    %v172 = vsub.s32 0, %v171
    %v173 = vrot.slane %v165, %v172
    %v174 = vadd.f32 %v173, %v110
    %v175 = vadd.f32 %v173, %v113
    %v176 = vadd.f32 %v173, %v116
    %v177 = vadd.f32 %v173, %v119
    %vm178 = vcmp.gt.f32.partialorder %v174, 0.0
    %vm179 = vcmp.gt.f32.partialorder %v175, 0.0
    %vm180 = vcmp.gt.f32.partialorder %v176, 0.0
    %vm181 = vcmp.gt.f32.partialorder %v177, 0.0
    %v182 = vmul.f32 %v174, 0.2
    %v183 = vmul.f32 %v175, 0.2
    %v184 = vmul.f32 %v176, 0.2
    %v185 = vmul.f32 %v177, 0.2
    %v186 = vsel %vm178, %v174, %v182
    %v187 = vsel %vm179, %v175, %v183
    %v188 = vsel %vm180, %v176, %v184
    %v189 = vsel %vm181, %v177, %v185
    %v190 = vadd.f32 %v186, %v19
    %v191 = vadd.f32 %v187, %v20
    %v192 = vadd.f32 %v188, %v21
    %v193 = vadd.f32 %v189, %v22
    %v194 = vsel %vm107, %v190, -inf
    %195 = vmax.xlane.f32.xlu0 %v194
    %v196 = vpop.xlane.xlu0 %195
    %v197 = vsel %vm107, %v191, -inf
    %198 = vmax.xlane.f32.xlu0 %v197
    %v199 = vpop.xlane.xlu0 %198
    %v200 = vsel %vm107, %v192, -inf
    %201 = vmax.xlane.f32.xlu0 %v200
    %v202 = vpop.xlane.xlu0 %201
    %v203 = vsel %vm107, %v193, -inf
    %204 = vmax.xlane.f32.xlu0 %v203
    %v205 = vpop.xlane.xlu0 %204
    %v206 = vsub.f32 %v190, %v196
    %v207 = vsub.f32 %v191, %v199
    %v208 = vsub.f32 %v192, %v202
    %v209 = vsub.f32 %v193, %v205
    %v210 = vmul.f32 %v206, 1.442695
    %v211 = vpow.pop %v210
    %v212 = vmul.f32 %v207, 1.442695
    %v213 = vpow.pop %v212
    %v214 = vmul.f32 %v208, 1.442695
    %v215 = vpow.pop %v214
    %v216 = vmul.f32 %v209, 1.442695
    %v217 = vpow.pop %v216
    %v218 = vsel %vm107, %v211, 0.0
    %219 = vadd.xlane.f32.xlu0 %v218
    %v220 = vpop.xlane.xlu0 %219
    %v221 = vsel %vm107, %v213, 0.0
    %222 = vadd.xlane.f32.xlu0 %v221
    %v223 = vpop.xlane.xlu0 %222
    %v224 = vsel %vm107, %v215, 0.0
    %225 = vadd.xlane.f32.xlu0 %v224
    %v226 = vpop.xlane.xlu0 %225
    %v227 = vsel %vm107, %v217, 0.0
    %228 = vadd.xlane.f32.xlu0 %v227
    %v229 = vpop.xlane.xlu0 %228
    %v230 = vrcp.pop %v220
    %v231 = vrcp.pop %v223
    %v232 = vrcp.pop %v226
    %v233 = vrcp.pop %v229
    %v234 = vmul.f32 %v211, %v230
    %v235 = vmul.f32 %v213, %v231
    %v236 = vmul.f32 %v215, %v232
    %v237 = vmul.f32 %v217, %v233
    %v238 = vpack.c.bf16 %v235, %v234
    %v239 = vpack.c.bf16 %v237, %v236
    %v241 = vsel %vm107, %v238, 0
    %v244 = vsel %vm107, %v239, 0
    %246 = vmatprep.subr.bf16.mxu0 0
    %247 = vmatpush1.bf16.msra.mxu0 0
    %248 = vmatprep.subr.bf16.mxu0 0
    %249 = vmatpush1.bf16.msra.mxu0 0
    %250 = vmatprep.subr.bf16.mxu0 0
    %251 = vmatpush1.bf16.msra.mxu0 0
    %252 = vmatprep.subr.bf16.mxu0 0
    %253 = vmatpush1.bf16.msra.mxu0 0
    %254 = vmatprep.subr.bf16.mxu0 0
    %255 = vmatpush1.bf16.msra.mxu0 0
    %256 = vmatprep.subr.bf16.mxu0 0
    %257 = vmatpush1.bf16.msra.mxu0 0
    %258 = vmatprep.subr.bf16.mxu0 0
    %259 = vmatpush1.bf16.msra.mxu0 %v94
    %260 = vmatprep.subr.bf16.mxu0 0
    %261 = vmatpush1.bf16.msra.mxu0 %v93
    %262 = vmatprep.subr.bf16.mxu0 0
    %263 = vmatpush2.bf16.msra.mxu0 0
    %264 = vmatprep.subr.bf16.mxu0 0
    %265 = vmatpush2.bf16.msra.mxu0 0
    %266 = vmatprep.subr.bf16.mxu0 0
    %267 = vmatpush2.bf16.msra.mxu0 0
    %268 = vmatprep.subr.bf16.mxu0 0
    %269 = vmatpush2.bf16.msra.mxu0 0
    %270 = vmatprep.subr.bf16.mxu0 0
    %271 = vmatpush2.bf16.msra.mxu0 0
    %272 = vmatprep.subr.bf16.mxu0 0
    %273 = vmatpush2.bf16.msra.mxu0 0
    %274 = vmatprep.subr.bf16.mxu0 0
    %275 = vmatpush2.bf16.msra.mxu0 0
    %276 = vmatprep.subr.bf16.mxu0 0
    %277 = vmatpush2.bf16.msra.mxu0 0
    %278 = vmatprep.mubr.bf16.mxu0 0
    %279 = vmatmul.mubr.bf16.gmra.mxu0 %v241
    %v280 = vpop.f32.mrf.mxu0
    %v281 = vadd.f32 0.0, %v280
    %v282 = vpop.f32.mrf.mxu0
    %v283 = vpop.f32.mrf.mxu0
    %v284 = vadd.f32 0.0, %v283
    %v285 = vpop.f32.mrf.mxu0
    %286 = vmatprep.mubr.bf16.mxu0 0
    %287 = vmatmul.mubr.bf16.gmra.mxu0 %v244
    %v288 = vpop.f32.mrf.mxu0
    %v289 = vadd.f32 0.0, %v288
    %v290 = vpop.f32.mrf.mxu0
    %v291 = vpop.f32.mrf.mxu0
    %v292 = vadd.f32 0.0, %v291
    %v293 = vpop.f32.mrf.mxu0
    %294 = vdwg.mxu0
    %299 = vrot.lane.b32.xlu0 %v103, 96
    %v300 = vpop.permute.xlu0 %299
    %301 = vrot.lane.b32.xlu0 %v104, 96
    %v302 = vpop.permute.xlu0 %301
    %303 = vrot.lane.b32.xlu0 %v105, 96
    %v304 = vpop.permute.xlu0 %303
    %305 = vrot.lane.b32.xlu0 %v106, 96
    %v306 = vpop.permute.xlu0 %305
    %v311 = vsel %vm107, %v300, 0.0
    %312 = vadd.xlane.f32.xlu0 %v311
    %v313 = vpop.xlane.xlu0 %312
    %v314 = vsel %vm107, %v302, 0.0
    %315 = vadd.xlane.f32.xlu0 %v314
    %v316 = vpop.xlane.xlu0 %315
    %v317 = vsel %vm107, %v304, 0.0
    %318 = vadd.xlane.f32.xlu0 %v317
    %v319 = vpop.xlane.xlu0 %318
    %v320 = vsel %vm107, %v306, 0.0
    %321 = vadd.xlane.f32.xlu0 %v320
    %v322 = vpop.xlane.xlu0 %321
    %324 = vrot.lane.b32.xlu0 %v120, 96
    %v325 = vpop.permute.xlu0 %324
    %328 = vrot.lane.b32.xlu0 %v93, 96
    %v329 = vpop.permute.xlu0 %328
    %330 = vrot.lane.b32.xlu0 %v94, 96
    %v331 = vpop.permute.xlu0 %330
    %v333 = vsel %vm107, %v325, 0
    %v336 = vsel %vm107, %v329, 0
    %v339 = vsel %vm107, %v331, 0
    %341 = vmatprep.subr.bf16.mxu0 0
    %342 = vmatpush1.bf16.xpose.msra.mxu0 0
    %343 = vmatprep.subr.bf16.mxu0 0
    %344 = vmatpush1.bf16.xpose.msra.mxu0 0
    %345 = vmatprep.subr.bf16.mxu0 0
    %346 = vmatpush1.bf16.xpose.msra.mxu0 0
    %347 = vmatprep.subr.bf16.mxu0 0
    %348 = vmatpush1.bf16.xpose.msra.mxu0 0
    %349 = vmatprep.subr.bf16.mxu0 0
    %350 = vmatpush1.bf16.xpose.msra.mxu0 0
    %351 = vmatprep.subr.bf16.mxu0 0
    %352 = vmatpush1.bf16.xpose.msra.mxu0 0
    %353 = vmatprep.subr.bf16.mxu0 0
    %354 = vmatpush1.bf16.xpose.msra.mxu0 %v339
    %355 = vmatprep.subr.bf16.mxu0 0
    %356 = vmatpush1.bf16.xpose.msra.mxu0 %v336
    %357 = vmatprep.subr.bf16.mxu0 0
    %358 = vmatpush2.bf16.xpose.msra.mxu0 0
    %359 = vmatprep.subr.bf16.mxu0 0
    %360 = vmatpush2.bf16.xpose.msra.mxu0 0
    %361 = vmatprep.subr.bf16.mxu0 0
    %362 = vmatpush2.bf16.xpose.msra.mxu0 0
    %363 = vmatprep.subr.bf16.mxu0 0
    %364 = vmatpush2.bf16.xpose.msra.mxu0 0
    %365 = vmatprep.subr.bf16.mxu0 0
    %366 = vmatpush2.bf16.xpose.msra.mxu0 0
    %367 = vmatprep.subr.bf16.mxu0 0
    %368 = vmatpush2.bf16.xpose.msra.mxu0 0
    %369 = vmatprep.subr.bf16.mxu0 0
    %370 = vmatpush2.bf16.xpose.msra.mxu0 0
    %371 = vmatprep.subr.bf16.mxu0 0
    %372 = vmatpush2.bf16.xpose.msra.mxu0 0
    %373 = vmatprep.mubr.bf16.mxu0 0
    %374 = vmatmul.mubr.bf16.gmra.mxu0 %v333
    %v375 = vpop.f32.mrf.mxu0
    %v376 = vadd.f32 0.0, %v375
    %v377 = vpop.f32.mrf.mxu0
    %v378 = vpop.f32.mrf.mxu0
    %v379 = vpop.f32.mrf.mxu0
    %380 = vdwg.mxu0
    %v381 = vlaneseq
    %v382 = vshrl.u32 %v381, 7
    %v383 = vsub.s32 0, %v382
    %v384 = vrot.slane %v376, %v383
    %v385 = vadd.f32 %v384, %v313
    %v386 = vadd.f32 %v384, %v316
    %v387 = vadd.f32 %v384, %v319
    %v388 = vadd.f32 %v384, %v322
    %vm389 = vcmp.gt.f32.partialorder %v385, 0.0
    %vm390 = vcmp.gt.f32.partialorder %v386, 0.0
    %vm391 = vcmp.gt.f32.partialorder %v387, 0.0
    %vm392 = vcmp.gt.f32.partialorder %v388, 0.0
    %v393 = vmul.f32 %v385, 0.2
    %v394 = vmul.f32 %v386, 0.2
    %v395 = vmul.f32 %v387, 0.2
    %v396 = vmul.f32 %v388, 0.2
    %v397 = vsel %vm389, %v385, %v393
    %v398 = vsel %vm390, %v386, %v394
    %v399 = vsel %vm391, %v387, %v395
    %v400 = vsel %vm392, %v388, %v396
    %v401 = vadd.f32 %v397, %v19
    %v402 = vadd.f32 %v398, %v20
    %v403 = vadd.f32 %v399, %v21
    %v404 = vadd.f32 %v400, %v22
    %v405 = vsel %vm107, %v401, -inf
    %406 = vmax.xlane.f32.xlu0 %v405
    %v407 = vpop.xlane.xlu0 %406
    %v408 = vsel %vm107, %v402, -inf
    %409 = vmax.xlane.f32.xlu0 %v408
    %v410 = vpop.xlane.xlu0 %409
    %v411 = vsel %vm107, %v403, -inf
    %412 = vmax.xlane.f32.xlu0 %v411
    %v413 = vpop.xlane.xlu0 %412
    %v414 = vsel %vm107, %v404, -inf
    %415 = vmax.xlane.f32.xlu0 %v414
    %v416 = vpop.xlane.xlu0 %415
    %v417 = vsub.f32 %v401, %v407
    %v418 = vsub.f32 %v402, %v410
    %v419 = vsub.f32 %v403, %v413
    %v420 = vsub.f32 %v404, %v416
    %v421 = vmul.f32 %v417, 1.442695
    %v422 = vpow.pop %v421
    %v423 = vmul.f32 %v418, 1.442695
    %v424 = vpow.pop %v423
    %v425 = vmul.f32 %v419, 1.442695
    %v426 = vpow.pop %v425
    %v427 = vmul.f32 %v420, 1.442695
    %v428 = vpow.pop %v427
    %v429 = vsel %vm107, %v422, 0.0
    %430 = vadd.xlane.f32.xlu0 %v429
    %v431 = vpop.xlane.xlu0 %430
    %v432 = vsel %vm107, %v424, 0.0
    %433 = vadd.xlane.f32.xlu0 %v432
    %v434 = vpop.xlane.xlu0 %433
    %v435 = vsel %vm107, %v426, 0.0
    %436 = vadd.xlane.f32.xlu0 %v435
    %v437 = vpop.xlane.xlu0 %436
    %v438 = vsel %vm107, %v428, 0.0
    %439 = vadd.xlane.f32.xlu0 %v438
    %v440 = vpop.xlane.xlu0 %439
    %v441 = vrcp.pop %v431
    %v442 = vrcp.pop %v434
    %v443 = vrcp.pop %v437
    %v444 = vrcp.pop %v440
    %v445 = vmul.f32 %v422, %v441
    %v446 = vmul.f32 %v424, %v442
    %v447 = vmul.f32 %v426, %v443
    %v448 = vmul.f32 %v428, %v444
    %v449 = vpack.c.bf16 %v446, %v445
    %v450 = vpack.c.bf16 %v448, %v447
    %v454 = vsel %vm107, %v449, 0
    %v457 = vsel %vm107, %v450, 0
    %459 = vmatprep.subr.bf16.mxu0 0
    %460 = vmatpush1.bf16.msra.mxu0 0
    %461 = vmatprep.subr.bf16.mxu0 0
    %462 = vmatpush1.bf16.msra.mxu0 0
    %463 = vmatprep.subr.bf16.mxu0 0
    %464 = vmatpush1.bf16.msra.mxu0 0
    %465 = vmatprep.subr.bf16.mxu0 0
    %466 = vmatpush1.bf16.msra.mxu0 0
    %467 = vmatprep.subr.bf16.mxu0 0
    %468 = vmatpush1.bf16.msra.mxu0 0
    %469 = vmatprep.subr.bf16.mxu0 0
    %470 = vmatpush1.bf16.msra.mxu0 0
    %471 = vmatprep.subr.bf16.mxu0 0
    %472 = vmatpush1.bf16.msra.mxu0 %v331
    %473 = vmatprep.subr.bf16.mxu0 0
    %474 = vmatpush1.bf16.msra.mxu0 %v329
    %475 = vmatprep.subr.bf16.mxu0 0
    %476 = vmatpush2.bf16.msra.mxu0 0
    %477 = vmatprep.subr.bf16.mxu0 0
    %478 = vmatpush2.bf16.msra.mxu0 0
    %479 = vmatprep.subr.bf16.mxu0 0
    %480 = vmatpush2.bf16.msra.mxu0 0
    %481 = vmatprep.subr.bf16.mxu0 0
    %482 = vmatpush2.bf16.msra.mxu0 0
    %483 = vmatprep.subr.bf16.mxu0 0
    %484 = vmatpush2.bf16.msra.mxu0 0
    %485 = vmatprep.subr.bf16.mxu0 0
    %486 = vmatpush2.bf16.msra.mxu0 0
    %487 = vmatprep.subr.bf16.mxu0 0
    %488 = vmatpush2.bf16.msra.mxu0 0
    %489 = vmatprep.subr.bf16.mxu0 0
    %490 = vmatpush2.bf16.msra.mxu0 0
    %491 = vmatprep.mubr.bf16.mxu0 0
    %492 = vmatmul.mubr.bf16.gmra.mxu0 %v454
    %v493 = vpop.f32.mrf.mxu0
    %v494 = vadd.f32 0.0, %v493
    %v495 = vpop.f32.mrf.mxu0
    %v496 = vpop.f32.mrf.mxu0
    %v497 = vadd.f32 0.0, %v496
    %v498 = vpop.f32.mrf.mxu0
    %499 = vmatprep.mubr.bf16.mxu0 0
    %500 = vmatmul.mubr.bf16.gmra.mxu0 %v457
    %v501 = vpop.f32.mrf.mxu0
    %v502 = vadd.f32 0.0, %v501
    %v503 = vpop.f32.mrf.mxu0
    %v504 = vpop.f32.mrf.mxu0
    %v505 = vadd.f32 0.0, %v504
    %v506 = vpop.f32.mrf.mxu0
    %507 = vdwg.mxu0
    %512 = vrot.lane.b32.xlu0 %v494, 32
    %v513 = vpop.permute.xlu0 %512
    %514 = vrot.lane.b32.xlu0 %v497, 32
    %v515 = vpop.permute.xlu0 %514
    %516 = vrot.lane.b32.xlu0 %v502, 32
    %v517 = vpop.permute.xlu0 %516
    %518 = vrot.lane.b32.xlu0 %v505, 32
    %v519 = vpop.permute.xlu0 %518
    %v524 = vsel %vm107, %v281, %v513
    %v525 = vsel %vm107, %v284, %v515
    %v526 = vsel %vm107, %v289, %v517
    %v527 = vsel %vm107, %v292, %v519
    %v528 = vpack.c.bf16 %v525, %v524
    %v529 = vpack.c.bf16 %v527, %v526
    %v530 = vld [vmem:[%s2 + $0x10] sm:$0xf]
    %v531 = vld [vmem:[%s2 + $0x18] sm:$0xf]
    %v532 = vld [vmem:[%s2 + $0x20] sm:$0xf]
    %v533 = vld [vmem:[%s2 + $0x28] sm:$0xf]
    %v534 = vld [vmem:[%s2 + $0x30] sm:$0xf]
    %v535 = vld [vmem:[%s2 + $0x38] sm:$0xf]
    %v536 = vld [vmem:[%s2 + $0x40] sm:$0xf]
    %v537 = vld [vmem:[%s2 + $0x48] sm:$0xf]
    %v538 = vld [vmem:[%s3 + $0x2] sm:$0x1]
    %v540 = vlaneseq
    %v541 = vshrl.u32 %v540, 7
    %v542 = vsub.s32 0, %v541
    %v543 = vrot.slane %v538, %v542
    %v553 = vunpack.c.l.b16 %v530
    %v554 = vunpack.c.l.b16 %v531
    %v555 = vunpack.c.l.b16 %v532
    %v556 = vunpack.c.l.b16 %v533
    %v557 = vunpack.c.l.b16 %v534
    %v558 = vunpack.c.l.b16 %v535
    %v559 = vunpack.c.l.b16 %v536
    %v560 = vunpack.c.l.b16 %v537
    %v561 = vpack.c.b16 %v554, %v553
    %v562 = vpack.c.b16 %v556, %v555
    %v563 = vpack.c.b16 %v558, %v557
    %v564 = vpack.c.b16 %v560, %v559
    %vm569 = vcmask 523264
    %v571 = vsel %vm569, %v528, 0
    %v574 = vsel %vm569, %v529, 0
    %576 = vmatprep.subr.bf16.mxu0 0
    %577 = vmatpush1.bf16.msra.mxu0 0
    %578 = vmatprep.subr.bf16.mxu0 0
    %579 = vmatpush1.bf16.msra.mxu0 0
    %580 = vmatprep.subr.bf16.mxu0 0
    %581 = vmatpush1.bf16.msra.mxu0 0
    %582 = vmatprep.subr.bf16.mxu0 0
    %583 = vmatpush1.bf16.msra.mxu0 0
    %584 = vmatprep.subr.bf16.mxu0 0
    %585 = vmatpush1.bf16.msra.mxu0 %v564
    %586 = vmatprep.subr.bf16.mxu0 0
    %587 = vmatpush1.bf16.msra.mxu0 %v563
    %588 = vmatprep.subr.bf16.mxu0 0
    %589 = vmatpush1.bf16.msra.mxu0 %v562
    %590 = vmatprep.subr.bf16.mxu0 0
    %591 = vmatpush1.bf16.msra.mxu0 %v561
    %592 = vmatprep.subr.bf16.mxu0 0
    %593 = vmatpush2.bf16.msra.mxu0 0
    %594 = vmatprep.subr.bf16.mxu0 0
    %595 = vmatpush2.bf16.msra.mxu0 0
    %596 = vmatprep.subr.bf16.mxu0 0
    %597 = vmatpush2.bf16.msra.mxu0 0
    %598 = vmatprep.subr.bf16.mxu0 0
    %599 = vmatpush2.bf16.msra.mxu0 0
    %600 = vmatprep.subr.bf16.mxu0 0
    %601 = vmatpush2.bf16.msra.mxu0 0
    %602 = vmatprep.subr.bf16.mxu0 0
    %603 = vmatpush2.bf16.msra.mxu0 0
    %604 = vmatprep.subr.bf16.mxu0 0
    %605 = vmatpush2.bf16.msra.mxu0 0
    %606 = vmatprep.subr.bf16.mxu0 0
    %607 = vmatpush2.bf16.msra.mxu0 0
    %608 = vmatprep.mubr.bf16.mxu0 0
    %609 = vmatmul.mubr.bf16.gmra.mxu0 %v571
    %v610 = vpop.f32.mrf.mxu0
    %v611 = vadd.f32 %v543, %v610
    %v612 = vpop.f32.mrf.mxu0
    %v613 = vpop.f32.mrf.mxu0
    %v614 = vadd.f32 %v543, %v613
    %v615 = vpop.f32.mrf.mxu0
    %616 = vmatprep.mubr.bf16.mxu0 0
    %617 = vmatmul.mubr.bf16.gmra.mxu0 %v574
    %v618 = vpop.f32.mrf.mxu0
    %v619 = vadd.f32 %v543, %v618
    %v620 = vpop.f32.mrf.mxu0
    %v621 = vpop.f32.mrf.mxu0
    %v622 = vadd.f32 %v543, %v621
    %v623 = vpop.f32.mrf.mxu0
    %624 = vdwg.mxu0
    %vm625 = vcmp.gt.f32.partialorder %v611, 0.0
    %vm626 = vcmp.gt.f32.partialorder %v614, 0.0
    %vm627 = vcmp.gt.f32.partialorder %v619, 0.0
    %vm628 = vcmp.gt.f32.partialorder %v622, 0.0
    %v629 = vmul.f32 %v611, 0.2
    %v630 = vmul.f32 %v614, 0.2
    %v631 = vmul.f32 %v619, 0.2
    %v632 = vmul.f32 %v622, 0.2
    %v633 = vsel %vm625, %v611, %v629
    %v634 = vsel %vm626, %v614, %v630
    %v635 = vsel %vm627, %v619, %v631
    %v636 = vsel %vm628, %v622, %v632
    %v637 = vld [vmem:[%s3 + $0x3] sm:$0x1]
    %v638 = vld [vmem:[%s3 + $0x4] sm:$0x1]
    %v639 = vsel %vm107, %v633, 0.0
    %v640 = vsel %vm107, %v634, 0.0
    %v641 = vadd.f32 %v639, %v640
    %v642 = vsel %vm107, %v635, 0.0
    %v643 = vadd.f32 %v641, %v642
    %v644 = vsel %vm107, %v636, 0.0
    %v645 = vadd.f32 %v643, %v644
    %v646 = vrot.slane %v645, 4
    %v647 = vadd.f32 %v645, %v646
    %v648 = vrot.slane %v647, 2
    %v649 = vadd.f32 %v647, %v648
    %v650 = vrot.slane %v649, 1
    %v651 = vadd.f32 %v649, %v650
    %v652 = vmul.f32 %v651, 0.03125
    %v653 = vsub.f32 %v633, %v652
    %v654 = vsub.f32 %v634, %v652
    %v655 = vsub.f32 %v635, %v652
    %v656 = vsub.f32 %v636, %v652
    %v657 = vmul.f32 %v653, %v653
    %v658 = vmul.f32 %v654, %v654
    %v659 = vmul.f32 %v655, %v655
    %v660 = vmul.f32 %v656, %v656
    %v661 = vsel %vm107, %v657, 0.0
    %v662 = vsel %vm107, %v658, 0.0
    %v663 = vadd.f32 %v661, %v662
    %v664 = vsel %vm107, %v659, 0.0
    %v665 = vadd.f32 %v663, %v664
    %v666 = vsel %vm107, %v660, 0.0
    %v667 = vadd.f32 %v665, %v666
    %v668 = vrot.slane %v667, 4
    %v669 = vadd.f32 %v667, %v668
    %v670 = vrot.slane %v669, 2
    %v671 = vadd.f32 %v669, %v670
    %v672 = vrot.slane %v671, 1
    %v673 = vadd.f32 %v671, %v672
    %v674 = vmul.f32 %v673, 0.03125
    %v675 = vadd.f32 %v674, 1e-05
    %v676 = vrsqrt.pop %v675
    %v677 = vmul.f32 %v653, %v676
    %v678 = vmul.f32 %v654, %v676
    %v679 = vmul.f32 %v655, %v676
    %v680 = vmul.f32 %v656, %v676
    %v682 = vlaneseq
    %v683 = vshrl.u32 %v682, 7
    %v684 = vsub.s32 0, %v683
    %v685 = vrot.slane %v637, %v684
    %v687 = vmul.f32 %v677, %v685
    %v688 = vmul.f32 %v678, %v685
    %v689 = vmul.f32 %v679, %v685
    %v690 = vmul.f32 %v680, %v685
    %v692 = vlaneseq
    %v693 = vshrl.u32 %v692, 7
    %v694 = vsub.s32 0, %v693
    %v695 = vrot.slane %v638, %v694
    %v697 = vadd.f32 %v687, %v695
    %v698 = vadd.f32 %v688, %v695
    %v699 = vadd.f32 %v689, %v695
    %v700 = vadd.f32 %v690, %v695
    %v701 = vpack.c.bf16 %v698, %v697
    %v702 = vpack.c.bf16 %v700, %v699
    %v703 = vld [vmem:[%s2 + $0x50] sm:$0xf]
    %v704 = vld [vmem:[%s2 + $0x58] sm:$0xf]
    %v705 = vld [vmem:[%s2 + $0x60] sm:$0xf]
    %v706 = vld [vmem:[%s2 + $0x68] sm:$0xf]
    %v711 = vunpack.c.l.b16 %v703
    %v712 = vunpack.c.l.b16 %v704
    %v713 = vunpack.c.l.b16 %v705
    %v714 = vunpack.c.l.b16 %v706
    %v715 = vpack.c.b16 %v712, %v711
    %v716 = vpack.c.b16 %v714, %v713
    %v720 = vsel %vm107, %v701, 0
    %v723 = vsel %vm107, %v702, 0
    %725 = vmatprep.subr.bf16.mxu0 0
    %726 = vmatpush1.bf16.msra.mxu0 0
    %727 = vmatprep.subr.bf16.mxu0 0
    %728 = vmatpush1.bf16.msra.mxu0 0
    %729 = vmatprep.subr.bf16.mxu0 0
    %730 = vmatpush1.bf16.msra.mxu0 0
    %731 = vmatprep.subr.bf16.mxu0 0
    %732 = vmatpush1.bf16.msra.mxu0 0
    %733 = vmatprep.subr.bf16.mxu0 0
    %734 = vmatpush1.bf16.msra.mxu0 0
    %735 = vmatprep.subr.bf16.mxu0 0
    %736 = vmatpush1.bf16.msra.mxu0 0
    %737 = vmatprep.subr.bf16.mxu0 0
    %738 = vmatpush1.bf16.msra.mxu0 %v716
    %739 = vmatprep.subr.bf16.mxu0 0
    %740 = vmatpush1.bf16.msra.mxu0 %v715
    %741 = vmatprep.subr.bf16.mxu0 0
    %742 = vmatpush2.bf16.msra.mxu0 0
    %743 = vmatprep.subr.bf16.mxu0 0
    %744 = vmatpush2.bf16.msra.mxu0 0
    %745 = vmatprep.subr.bf16.mxu0 0
    %746 = vmatpush2.bf16.msra.mxu0 0
    %747 = vmatprep.subr.bf16.mxu0 0
    %748 = vmatpush2.bf16.msra.mxu0 0
    %749 = vmatprep.subr.bf16.mxu0 0
    %750 = vmatpush2.bf16.msra.mxu0 0
    %751 = vmatprep.subr.bf16.mxu0 0
    %752 = vmatpush2.bf16.msra.mxu0 0
    %753 = vmatprep.subr.bf16.mxu0 0
    %754 = vmatpush2.bf16.msra.mxu0 0
    %755 = vmatprep.subr.bf16.mxu0 0
    %756 = vmatpush2.bf16.msra.mxu0 0
    %757 = vmatprep.mubr.bf16.mxu0 0
    %758 = vmatmul.mubr.bf16.gmra.mxu0 %v720
    %v759 = vpop.f32.mrf.mxu0
    %v760 = vadd.f32 0.0, %v759
    %v761 = vpop.f32.mrf.mxu0
    %v762 = vpop.f32.mrf.mxu0
    %v763 = vadd.f32 0.0, %v762
    %v764 = vpop.f32.mrf.mxu0
    %765 = vmatprep.mubr.bf16.mxu0 0
    %766 = vmatmul.mubr.bf16.gmra.mxu0 %v723
    %v767 = vpop.f32.mrf.mxu0
    %v768 = vadd.f32 0.0, %v767
    %v769 = vpop.f32.mrf.mxu0
    %v770 = vpop.f32.mrf.mxu0
    %v771 = vadd.f32 0.0, %v770
    %v772 = vpop.f32.mrf.mxu0
    %773 = vdwg.mxu0
    %v774 = vpack.c.bf16 %v763, %v760
    %v775 = vpack.c.bf16 %v771, %v768
    %v776 = vld [vmem:[%s3 + $0x5] sm:$0x1]
    %v777 = vld [vmem:[%s3 + $0x6] sm:$0x1]
    %v779 = vlaneseq
    %v780 = vshrl.u32 %v779, 7
    %v781 = vsub.s32 0, %v780
    %v782 = vrot.slane %v777, %v781
    %v784 = vmul.f32 %v760, %v782
    %v785 = vmul.f32 %v763, %v782
    %v786 = vmul.f32 %v768, %v782
    %v787 = vmul.f32 %v771, %v782
    %v788 = vsel %vm107, %v784, 0.0
    %789 = vadd.xlane.f32.xlu0 %v788
    %v790 = vpop.xlane.xlu0 %789
    %v791 = vsel %vm107, %v785, 0.0
    %792 = vadd.xlane.f32.xlu0 %v791
    %v793 = vpop.xlane.xlu0 %792
    %v794 = vsel %vm107, %v786, 0.0
    %795 = vadd.xlane.f32.xlu0 %v794
    %v796 = vpop.xlane.xlu0 %795
    %v797 = vsel %vm107, %v787, 0.0
    %798 = vadd.xlane.f32.xlu0 %v797
    %v799 = vpop.xlane.xlu0 %798
    %v800 = vpack.c.bf16 %v776, %v776
    %v802 = vsel %vm107, %v800, 0
    %v805 = vsel %vm107, %v774, 0
    %v808 = vsel %vm107, %v775, 0
    %810 = vmatprep.subr.bf16.mxu0 0
    %811 = vmatpush1.bf16.xpose.msra.mxu0 0
    %812 = vmatprep.subr.bf16.mxu0 0
    %813 = vmatpush1.bf16.xpose.msra.mxu0 0
    %814 = vmatprep.subr.bf16.mxu0 0
    %815 = vmatpush1.bf16.xpose.msra.mxu0 0
    %816 = vmatprep.subr.bf16.mxu0 0
    %817 = vmatpush1.bf16.xpose.msra.mxu0 0
    %818 = vmatprep.subr.bf16.mxu0 0
    %819 = vmatpush1.bf16.xpose.msra.mxu0 0
    %820 = vmatprep.subr.bf16.mxu0 0
    %821 = vmatpush1.bf16.xpose.msra.mxu0 0
    %822 = vmatprep.subr.bf16.mxu0 0
    %823 = vmatpush1.bf16.xpose.msra.mxu0 %v808
    %824 = vmatprep.subr.bf16.mxu0 0
    %825 = vmatpush1.bf16.xpose.msra.mxu0 %v805
    %826 = vmatprep.subr.bf16.mxu0 0
    %827 = vmatpush2.bf16.xpose.msra.mxu0 0
    %828 = vmatprep.subr.bf16.mxu0 0
    %829 = vmatpush2.bf16.xpose.msra.mxu0 0
    %830 = vmatprep.subr.bf16.mxu0 0
    %831 = vmatpush2.bf16.xpose.msra.mxu0 0
    %832 = vmatprep.subr.bf16.mxu0 0
    %833 = vmatpush2.bf16.xpose.msra.mxu0 0
    %834 = vmatprep.subr.bf16.mxu0 0
    %835 = vmatpush2.bf16.xpose.msra.mxu0 0
    %836 = vmatprep.subr.bf16.mxu0 0
    %837 = vmatpush2.bf16.xpose.msra.mxu0 0
    %838 = vmatprep.subr.bf16.mxu0 0
    %839 = vmatpush2.bf16.xpose.msra.mxu0 0
    %840 = vmatprep.subr.bf16.mxu0 0
    %841 = vmatpush2.bf16.xpose.msra.mxu0 0
    %842 = vmatprep.mubr.bf16.mxu0 0
    %843 = vmatmul.mubr.bf16.gmra.mxu0 %v802
    %v844 = vpop.f32.mrf.mxu0
    %v845 = vadd.f32 0.0, %v844
    %v846 = vpop.f32.mrf.mxu0
    %v847 = vpop.f32.mrf.mxu0
    %v848 = vpop.f32.mrf.mxu0
    %849 = vdwg.mxu0
    %v850 = vlaneseq
    %v851 = vshrl.u32 %v850, 7
    %v852 = vsub.s32 0, %v851
    %v853 = vrot.slane %v845, %v852
    %v854 = vadd.f32 %v853, %v790
    %v855 = vadd.f32 %v853, %v793
    %v856 = vadd.f32 %v853, %v796
    %v857 = vadd.f32 %v853, %v799
    %vm858 = vcmp.gt.f32.partialorder %v854, 0.0
    %vm859 = vcmp.gt.f32.partialorder %v855, 0.0
    %vm860 = vcmp.gt.f32.partialorder %v856, 0.0
    %vm861 = vcmp.gt.f32.partialorder %v857, 0.0
    %v862 = vmul.f32 %v854, 0.2
    %v863 = vmul.f32 %v855, 0.2
    %v864 = vmul.f32 %v856, 0.2
    %v865 = vmul.f32 %v857, 0.2
    %v866 = vsel %vm858, %v854, %v862
    %v867 = vsel %vm859, %v855, %v863
    %v868 = vsel %vm860, %v856, %v864
    %v869 = vsel %vm861, %v857, %v865
    %v870 = vadd.f32 %v866, %v19
    %v871 = vadd.f32 %v867, %v20
    %v872 = vadd.f32 %v868, %v21
    %v873 = vadd.f32 %v869, %v22
    %v874 = vsel %vm107, %v870, -inf
    %875 = vmax.xlane.f32.xlu0 %v874
    %v876 = vpop.xlane.xlu0 %875
    %v877 = vsel %vm107, %v871, -inf
    %878 = vmax.xlane.f32.xlu0 %v877
    %v879 = vpop.xlane.xlu0 %878
    %v880 = vsel %vm107, %v872, -inf
    %881 = vmax.xlane.f32.xlu0 %v880
    %v882 = vpop.xlane.xlu0 %881
    %v883 = vsel %vm107, %v873, -inf
    %884 = vmax.xlane.f32.xlu0 %v883
    %v885 = vpop.xlane.xlu0 %884
    %v886 = vsub.f32 %v870, %v876
    %v887 = vsub.f32 %v871, %v879
    %v888 = vsub.f32 %v872, %v882
    %v889 = vsub.f32 %v873, %v885
    %v890 = vmul.f32 %v886, 1.442695
    %v891 = vpow.pop %v890
    %v892 = vmul.f32 %v887, 1.442695
    %v893 = vpow.pop %v892
    %v894 = vmul.f32 %v888, 1.442695
    %v895 = vpow.pop %v894
    %v896 = vmul.f32 %v889, 1.442695
    %v897 = vpow.pop %v896
    %v898 = vsel %vm107, %v891, 0.0
    %899 = vadd.xlane.f32.xlu0 %v898
    %v900 = vpop.xlane.xlu0 %899
    %v901 = vsel %vm107, %v893, 0.0
    %902 = vadd.xlane.f32.xlu0 %v901
    %v903 = vpop.xlane.xlu0 %902
    %v904 = vsel %vm107, %v895, 0.0
    %905 = vadd.xlane.f32.xlu0 %v904
    %v906 = vpop.xlane.xlu0 %905
    %v907 = vsel %vm107, %v897, 0.0
    %908 = vadd.xlane.f32.xlu0 %v907
    %v909 = vpop.xlane.xlu0 %908
    %v910 = vrcp.pop %v900
    %v911 = vrcp.pop %v903
    %v912 = vrcp.pop %v906
    %v913 = vrcp.pop %v909
    %v914 = vmul.f32 %v891, %v910
    %v915 = vmul.f32 %v893, %v911
    %v916 = vmul.f32 %v895, %v912
    %v917 = vmul.f32 %v897, %v913
    %v918 = vpack.c.bf16 %v915, %v914
    %v919 = vpack.c.bf16 %v917, %v916
    %v921 = vsel %vm107, %v918, 0
    %v924 = vsel %vm107, %v919, 0
    %926 = vmatprep.subr.bf16.mxu0 0
    %927 = vmatpush1.bf16.msra.mxu0 0
    %928 = vmatprep.subr.bf16.mxu0 0
    %929 = vmatpush1.bf16.msra.mxu0 0
    %930 = vmatprep.subr.bf16.mxu0 0
    %931 = vmatpush1.bf16.msra.mxu0 0
    %932 = vmatprep.subr.bf16.mxu0 0
    %933 = vmatpush1.bf16.msra.mxu0 0
    %934 = vmatprep.subr.bf16.mxu0 0
    %935 = vmatpush1.bf16.msra.mxu0 0
    %936 = vmatprep.subr.bf16.mxu0 0
    %937 = vmatpush1.bf16.msra.mxu0 0
    %938 = vmatprep.subr.bf16.mxu0 0
    %939 = vmatpush1.bf16.msra.mxu0 %v775
    %940 = vmatprep.subr.bf16.mxu0 0
    %941 = vmatpush1.bf16.msra.mxu0 %v774
    %942 = vmatprep.subr.bf16.mxu0 0
    %943 = vmatpush2.bf16.msra.mxu0 0
    %944 = vmatprep.subr.bf16.mxu0 0
    %945 = vmatpush2.bf16.msra.mxu0 0
    %946 = vmatprep.subr.bf16.mxu0 0
    %947 = vmatpush2.bf16.msra.mxu0 0
    %948 = vmatprep.subr.bf16.mxu0 0
    %949 = vmatpush2.bf16.msra.mxu0 0
    %950 = vmatprep.subr.bf16.mxu0 0
    %951 = vmatpush2.bf16.msra.mxu0 0
    %952 = vmatprep.subr.bf16.mxu0 0
    %953 = vmatpush2.bf16.msra.mxu0 0
    %954 = vmatprep.subr.bf16.mxu0 0
    %955 = vmatpush2.bf16.msra.mxu0 0
    %956 = vmatprep.subr.bf16.mxu0 0
    %957 = vmatpush2.bf16.msra.mxu0 0
    %958 = vmatprep.mubr.bf16.mxu0 0
    %959 = vmatmul.mubr.bf16.gmra.mxu0 %v921
    %v960 = vpop.f32.mrf.mxu0
    %v961 = vadd.f32 0.0, %v960
    %v962 = vpop.f32.mrf.mxu0
    %v963 = vpop.f32.mrf.mxu0
    %v964 = vadd.f32 0.0, %v963
    %v965 = vpop.f32.mrf.mxu0
    %966 = vmatprep.mubr.bf16.mxu0 0
    %967 = vmatmul.mubr.bf16.gmra.mxu0 %v924
    %v968 = vpop.f32.mrf.mxu0
    %v969 = vadd.f32 0.0, %v968
    %v970 = vpop.f32.mrf.mxu0
    %v971 = vpop.f32.mrf.mxu0
    %v972 = vadd.f32 0.0, %v971
    %v973 = vpop.f32.mrf.mxu0
    %974 = vdwg.mxu0
    %979 = vrot.lane.b32.xlu0 %v784, 96
    %v980 = vpop.permute.xlu0 %979
    %981 = vrot.lane.b32.xlu0 %v785, 96
    %v982 = vpop.permute.xlu0 %981
    %983 = vrot.lane.b32.xlu0 %v786, 96
    %v984 = vpop.permute.xlu0 %983
    %985 = vrot.lane.b32.xlu0 %v787, 96
    %v986 = vpop.permute.xlu0 %985
    %v991 = vsel %vm107, %v980, 0.0
    %992 = vadd.xlane.f32.xlu0 %v991
    %v993 = vpop.xlane.xlu0 %992
    %v994 = vsel %vm107, %v982, 0.0
    %995 = vadd.xlane.f32.xlu0 %v994
    %v996 = vpop.xlane.xlu0 %995
    %v997 = vsel %vm107, %v984, 0.0
    %998 = vadd.xlane.f32.xlu0 %v997
    %v999 = vpop.xlane.xlu0 %998
    %v1000 = vsel %vm107, %v986, 0.0
    %1001 = vadd.xlane.f32.xlu0 %v1000
    %v1002 = vpop.xlane.xlu0 %1001
    %1004 = vrot.lane.b32.xlu0 %v800, 96
    %v1005 = vpop.permute.xlu0 %1004
    %1008 = vrot.lane.b32.xlu0 %v774, 96
    %v1009 = vpop.permute.xlu0 %1008
    %1010 = vrot.lane.b32.xlu0 %v775, 96
    %v1011 = vpop.permute.xlu0 %1010
    %v1013 = vsel %vm107, %v1005, 0
    %v1016 = vsel %vm107, %v1009, 0
    %v1019 = vsel %vm107, %v1011, 0
    %1021 = vmatprep.subr.bf16.mxu0 0
    %1022 = vmatpush1.bf16.xpose.msra.mxu0 0
    %1023 = vmatprep.subr.bf16.mxu0 0
    %1024 = vmatpush1.bf16.xpose.msra.mxu0 0
    %1025 = vmatprep.subr.bf16.mxu0 0
    %1026 = vmatpush1.bf16.xpose.msra.mxu0 0
    %1027 = vmatprep.subr.bf16.mxu0 0
    %1028 = vmatpush1.bf16.xpose.msra.mxu0 0
    %1029 = vmatprep.subr.bf16.mxu0 0
    %1030 = vmatpush1.bf16.xpose.msra.mxu0 0
    %1031 = vmatprep.subr.bf16.mxu0 0
    %1032 = vmatpush1.bf16.xpose.msra.mxu0 0
    %1033 = vmatprep.subr.bf16.mxu0 0
    %1034 = vmatpush1.bf16.xpose.msra.mxu0 %v1019
    %1035 = vmatprep.subr.bf16.mxu0 0
    %1036 = vmatpush1.bf16.xpose.msra.mxu0 %v1016
    %1037 = vmatprep.subr.bf16.mxu0 0
    %1038 = vmatpush2.bf16.xpose.msra.mxu0 0
    %1039 = vmatprep.subr.bf16.mxu0 0
    %1040 = vmatpush2.bf16.xpose.msra.mxu0 0
    %1041 = vmatprep.subr.bf16.mxu0 0
    %1042 = vmatpush2.bf16.xpose.msra.mxu0 0
    %1043 = vmatprep.subr.bf16.mxu0 0
    %1044 = vmatpush2.bf16.xpose.msra.mxu0 0
    %1045 = vmatprep.subr.bf16.mxu0 0
    %1046 = vmatpush2.bf16.xpose.msra.mxu0 0
    %1047 = vmatprep.subr.bf16.mxu0 0
    %1048 = vmatpush2.bf16.xpose.msra.mxu0 0
    %1049 = vmatprep.subr.bf16.mxu0 0
    %1050 = vmatpush2.bf16.xpose.msra.mxu0 0
    %1051 = vmatprep.subr.bf16.mxu0 0
    %1052 = vmatpush2.bf16.xpose.msra.mxu0 0
    %1053 = vmatprep.mubr.bf16.mxu0 0
    %1054 = vmatmul.mubr.bf16.gmra.mxu0 %v1013
    %v1055 = vpop.f32.mrf.mxu0
    %v1056 = vadd.f32 0.0, %v1055
    %v1057 = vpop.f32.mrf.mxu0
    %v1058 = vpop.f32.mrf.mxu0
    %v1059 = vpop.f32.mrf.mxu0
    %1060 = vdwg.mxu0
    %v1061 = vlaneseq
    %v1062 = vshrl.u32 %v1061, 7
    %v1063 = vsub.s32 0, %v1062
    %v1064 = vrot.slane %v1056, %v1063
    %v1065 = vadd.f32 %v1064, %v993
    %v1066 = vadd.f32 %v1064, %v996
    %v1067 = vadd.f32 %v1064, %v999
    %v1068 = vadd.f32 %v1064, %v1002
    %vm1069 = vcmp.gt.f32.partialorder %v1065, 0.0
    %vm1070 = vcmp.gt.f32.partialorder %v1066, 0.0
    %vm1071 = vcmp.gt.f32.partialorder %v1067, 0.0
    %vm1072 = vcmp.gt.f32.partialorder %v1068, 0.0
    %v1073 = vmul.f32 %v1065, 0.2
    %v1074 = vmul.f32 %v1066, 0.2
    %v1075 = vmul.f32 %v1067, 0.2
    %v1076 = vmul.f32 %v1068, 0.2
    %v1077 = vsel %vm1069, %v1065, %v1073
    %v1078 = vsel %vm1070, %v1066, %v1074
    %v1079 = vsel %vm1071, %v1067, %v1075
    %v1080 = vsel %vm1072, %v1068, %v1076
    %v1081 = vadd.f32 %v1077, %v19
    %v1082 = vadd.f32 %v1078, %v20
    %v1083 = vadd.f32 %v1079, %v21
    %v1084 = vadd.f32 %v1080, %v22
    %v1085 = vsel %vm107, %v1081, -inf
    %1086 = vmax.xlane.f32.xlu0 %v1085
    %v1087 = vpop.xlane.xlu0 %1086
    %v1088 = vsel %vm107, %v1082, -inf
    %1089 = vmax.xlane.f32.xlu0 %v1088
    %v1090 = vpop.xlane.xlu0 %1089
    %v1091 = vsel %vm107, %v1083, -inf
    %1092 = vmax.xlane.f32.xlu0 %v1091
    %v1093 = vpop.xlane.xlu0 %1092
    %v1094 = vsel %vm107, %v1084, -inf
    %1095 = vmax.xlane.f32.xlu0 %v1094
    %v1096 = vpop.xlane.xlu0 %1095
    %v1097 = vsub.f32 %v1081, %v1087
    %v1098 = vsub.f32 %v1082, %v1090
    %v1099 = vsub.f32 %v1083, %v1093
    %v1100 = vsub.f32 %v1084, %v1096
    %v1101 = vmul.f32 %v1097, 1.442695
    %v1102 = vpow.pop %v1101
    %v1103 = vmul.f32 %v1098, 1.442695
    %v1104 = vpow.pop %v1103
    %v1105 = vmul.f32 %v1099, 1.442695
    %v1106 = vpow.pop %v1105
    %v1107 = vmul.f32 %v1100, 1.442695
    %v1108 = vpow.pop %v1107
    %v1109 = vsel %vm107, %v1102, 0.0
    %1110 = vadd.xlane.f32.xlu0 %v1109
    %v1111 = vpop.xlane.xlu0 %1110
    %v1112 = vsel %vm107, %v1104, 0.0
    %1113 = vadd.xlane.f32.xlu0 %v1112
    %v1114 = vpop.xlane.xlu0 %1113
    %v1115 = vsel %vm107, %v1106, 0.0
    %1116 = vadd.xlane.f32.xlu0 %v1115
    %v1117 = vpop.xlane.xlu0 %1116
    %v1118 = vsel %vm107, %v1108, 0.0
    %1119 = vadd.xlane.f32.xlu0 %v1118
    %v1120 = vpop.xlane.xlu0 %1119
    %v1121 = vrcp.pop %v1111
    %v1122 = vrcp.pop %v1114
    %v1123 = vrcp.pop %v1117
    %v1124 = vrcp.pop %v1120
    %v1125 = vmul.f32 %v1102, %v1121
    %v1126 = vmul.f32 %v1104, %v1122
    %v1127 = vmul.f32 %v1106, %v1123
    %v1128 = vmul.f32 %v1108, %v1124
    %v1129 = vpack.c.bf16 %v1126, %v1125
    %v1130 = vpack.c.bf16 %v1128, %v1127
    %v1134 = vsel %vm107, %v1129, 0
    %v1137 = vsel %vm107, %v1130, 0
    %1139 = vmatprep.subr.bf16.mxu0 0
    %1140 = vmatpush1.bf16.msra.mxu0 0
    %1141 = vmatprep.subr.bf16.mxu0 0
    %1142 = vmatpush1.bf16.msra.mxu0 0
    %1143 = vmatprep.subr.bf16.mxu0 0
    %1144 = vmatpush1.bf16.msra.mxu0 0
    %1145 = vmatprep.subr.bf16.mxu0 0
    %1146 = vmatpush1.bf16.msra.mxu0 0
    %1147 = vmatprep.subr.bf16.mxu0 0
    %1148 = vmatpush1.bf16.msra.mxu0 0
    %1149 = vmatprep.subr.bf16.mxu0 0
    %1150 = vmatpush1.bf16.msra.mxu0 0
    %1151 = vmatprep.subr.bf16.mxu0 0
    %1152 = vmatpush1.bf16.msra.mxu0 %v1011
    %1153 = vmatprep.subr.bf16.mxu0 0
    %1154 = vmatpush1.bf16.msra.mxu0 %v1009
    %1155 = vmatprep.subr.bf16.mxu0 0
    %1156 = vmatpush2.bf16.msra.mxu0 0
    %1157 = vmatprep.subr.bf16.mxu0 0
    %1158 = vmatpush2.bf16.msra.mxu0 0
    %1159 = vmatprep.subr.bf16.mxu0 0
    %1160 = vmatpush2.bf16.msra.mxu0 0
    %1161 = vmatprep.subr.bf16.mxu0 0
    %1162 = vmatpush2.bf16.msra.mxu0 0
    %1163 = vmatprep.subr.bf16.mxu0 0
    %1164 = vmatpush2.bf16.msra.mxu0 0
    %1165 = vmatprep.subr.bf16.mxu0 0
    %1166 = vmatpush2.bf16.msra.mxu0 0
    %1167 = vmatprep.subr.bf16.mxu0 0
    %1168 = vmatpush2.bf16.msra.mxu0 0
    %1169 = vmatprep.subr.bf16.mxu0 0
    %1170 = vmatpush2.bf16.msra.mxu0 0
    %1171 = vmatprep.mubr.bf16.mxu0 0
    %1172 = vmatmul.mubr.bf16.gmra.mxu0 %v1134
    %v1173 = vpop.f32.mrf.mxu0
    %v1174 = vadd.f32 0.0, %v1173
    %v1175 = vpop.f32.mrf.mxu0
    %v1176 = vpop.f32.mrf.mxu0
    %v1177 = vadd.f32 0.0, %v1176
    %v1178 = vpop.f32.mrf.mxu0
    %1179 = vmatprep.mubr.bf16.mxu0 0
    %1180 = vmatmul.mubr.bf16.gmra.mxu0 %v1137
    %v1181 = vpop.f32.mrf.mxu0
    %v1182 = vadd.f32 0.0, %v1181
    %v1183 = vpop.f32.mrf.mxu0
    %v1184 = vpop.f32.mrf.mxu0
    %v1185 = vadd.f32 0.0, %v1184
    %v1186 = vpop.f32.mrf.mxu0
    %1187 = vdwg.mxu0
    %1192 = vrot.lane.b32.xlu0 %v1174, 32
    %v1193 = vpop.permute.xlu0 %1192
    %1194 = vrot.lane.b32.xlu0 %v1177, 32
    %v1195 = vpop.permute.xlu0 %1194
    %1196 = vrot.lane.b32.xlu0 %v1182, 32
    %v1197 = vpop.permute.xlu0 %1196
    %1198 = vrot.lane.b32.xlu0 %v1185, 32
    %v1199 = vpop.permute.xlu0 %1198
    %v1204 = vsel %vm107, %v961, %v1193
    %v1205 = vsel %vm107, %v964, %v1195
    %v1206 = vsel %vm107, %v969, %v1197
    %v1207 = vsel %vm107, %v972, %v1199
    %v1208 = vpack.c.bf16 %v1205, %v1204
    %v1209 = vpack.c.bf16 %v1207, %v1206
    %v1210 = vld [vmem:[%s2 + $0x70] sm:$0xf]
    %v1211 = vld [vmem:[%s2 + $0x78] sm:$0xf]
    %v1212 = vld [vmem:[%s2 + $0x80] sm:$0xf]
    %v1213 = vld [vmem:[%s2 + $0x88] sm:$0xf]
    %v1214 = vld [vmem:[%s2 + $0x90] sm:$0xf]
    %v1215 = vld [vmem:[%s2 + $0x98] sm:$0xf]
    %v1216 = vld [vmem:[%s2 + $0xa0] sm:$0xf]
    %v1217 = vld [vmem:[%s2 + $0xa8] sm:$0xf]
    %v1218 = vld [vmem:[%s3 + $0x7] sm:$0x1]
    %v1220 = vlaneseq
    %v1221 = vshrl.u32 %v1220, 7
    %v1222 = vsub.s32 0, %v1221
    %v1223 = vrot.slane %v1218, %v1222
    %v1233 = vunpack.c.l.b16 %v1210
    %v1234 = vunpack.c.l.b16 %v1211
    %v1235 = vunpack.c.l.b16 %v1212
    %v1236 = vunpack.c.l.b16 %v1213
    %v1237 = vunpack.c.l.b16 %v1214
    %v1238 = vunpack.c.l.b16 %v1215
    %v1239 = vunpack.c.l.b16 %v1216
    %v1240 = vunpack.c.l.b16 %v1217
    %v1241 = vpack.c.b16 %v1234, %v1233
    %v1242 = vpack.c.b16 %v1236, %v1235
    %v1243 = vpack.c.b16 %v1238, %v1237
    %v1244 = vpack.c.b16 %v1240, %v1239
    %v1250 = vsel %vm569, %v1208, 0
    %v1253 = vsel %vm569, %v1209, 0
    %1255 = vmatprep.subr.bf16.mxu0 0
    %1256 = vmatpush1.bf16.msra.mxu0 0
    %1257 = vmatprep.subr.bf16.mxu0 0
    %1258 = vmatpush1.bf16.msra.mxu0 0
    %1259 = vmatprep.subr.bf16.mxu0 0
    %1260 = vmatpush1.bf16.msra.mxu0 0
    %1261 = vmatprep.subr.bf16.mxu0 0
    %1262 = vmatpush1.bf16.msra.mxu0 0
    %1263 = vmatprep.subr.bf16.mxu0 0
    %1264 = vmatpush1.bf16.msra.mxu0 %v1244
    %1265 = vmatprep.subr.bf16.mxu0 0
    %1266 = vmatpush1.bf16.msra.mxu0 %v1243
    %1267 = vmatprep.subr.bf16.mxu0 0
    %1268 = vmatpush1.bf16.msra.mxu0 %v1242
    %1269 = vmatprep.subr.bf16.mxu0 0
    %1270 = vmatpush1.bf16.msra.mxu0 %v1241
    %1271 = vmatprep.subr.bf16.mxu0 0
    %1272 = vmatpush2.bf16.msra.mxu0 0
    %1273 = vmatprep.subr.bf16.mxu0 0
    %1274 = vmatpush2.bf16.msra.mxu0 0
    %1275 = vmatprep.subr.bf16.mxu0 0
    %1276 = vmatpush2.bf16.msra.mxu0 0
    %1277 = vmatprep.subr.bf16.mxu0 0
    %1278 = vmatpush2.bf16.msra.mxu0 0
    %1279 = vmatprep.subr.bf16.mxu0 0
    %1280 = vmatpush2.bf16.msra.mxu0 0
    %1281 = vmatprep.subr.bf16.mxu0 0
    %1282 = vmatpush2.bf16.msra.mxu0 0
    %1283 = vmatprep.subr.bf16.mxu0 0
    %1284 = vmatpush2.bf16.msra.mxu0 0
    %1285 = vmatprep.subr.bf16.mxu0 0
    %1286 = vmatpush2.bf16.msra.mxu0 0
    %1287 = vmatprep.mubr.bf16.mxu0 0
    %1288 = vmatmul.mubr.bf16.gmra.mxu0 %v1250
    %v1289 = vpop.f32.mrf.mxu0
    %v1290 = vadd.f32 %v1223, %v1289
    %v1291 = vpop.f32.mrf.mxu0
    %v1292 = vpop.f32.mrf.mxu0
    %v1293 = vadd.f32 %v1223, %v1292
    %v1294 = vpop.f32.mrf.mxu0
    %1295 = vmatprep.mubr.bf16.mxu0 0
    %1296 = vmatmul.mubr.bf16.gmra.mxu0 %v1253
    %v1297 = vpop.f32.mrf.mxu0
    %v1298 = vadd.f32 %v1223, %v1297
    %v1299 = vpop.f32.mrf.mxu0
    %v1300 = vpop.f32.mrf.mxu0
    %v1301 = vadd.f32 %v1223, %v1300
    %v1302 = vpop.f32.mrf.mxu0
    %1303 = vdwg.mxu0
    %vm1304 = vcmp.gt.f32.partialorder %v1290, 0.0
    %vm1305 = vcmp.gt.f32.partialorder %v1293, 0.0
    %vm1306 = vcmp.gt.f32.partialorder %v1298, 0.0
    %vm1307 = vcmp.gt.f32.partialorder %v1301, 0.0
    %v1308 = vmul.f32 %v1290, 0.2
    %v1309 = vmul.f32 %v1293, 0.2
    %v1310 = vmul.f32 %v1298, 0.2
    %v1311 = vmul.f32 %v1301, 0.2
    %v1312 = vsel %vm1304, %v1290, %v1308
    %v1313 = vsel %vm1305, %v1293, %v1309
    %v1314 = vsel %vm1306, %v1298, %v1310
    %v1315 = vsel %vm1307, %v1301, %v1311
    %v1316 = vpack.c.bf16 %v1313, %v1312
    %v1317 = vpack.c.bf16 %v1315, %v1314
    %v1318 = vld [vmem:[%s2 + $0xb0] sm:$0xf]
    %v1319 = vld [vmem:[%s2 + $0xb8] sm:$0xf]
    %v1320 = vld [vmem:[%s2 + $0xc0] sm:$0xf]
    %v1321 = vld [vmem:[%s2 + $0xc8] sm:$0xf]
    %v1322 = vld [vmem:[%s2 + $0xd0] sm:$0xf]
    %v1323 = vld [vmem:[%s2 + $0xd8] sm:$0xf]
    %v1324 = vld [vmem:[%s2 + $0xe0] sm:$0xf]
    %v1325 = vld [vmem:[%s2 + $0xe8] sm:$0xf]
    %v1326 = vld [vmem:[%s3 + $0x8] sm:$0x1]
    %v1328 = vlaneseq
    %v1329 = vshrl.u32 %v1328, 7
    %v1330 = vsub.s32 0, %v1329
    %v1331 = vrot.slane %v1326, %v1330
    %v1341 = vunpack.c.l.b16 %v1318
    %v1342 = vunpack.c.l.b16 %v1319
    %v1343 = vunpack.c.l.b16 %v1320
    %v1344 = vunpack.c.l.b16 %v1321
    %v1345 = vunpack.c.l.b16 %v1322
    %v1346 = vunpack.c.l.b16 %v1323
    %v1347 = vunpack.c.l.b16 %v1324
    %v1348 = vunpack.c.l.b16 %v1325
    %v1349 = vpack.c.b16 %v1342, %v1341
    %v1350 = vpack.c.b16 %v1344, %v1343
    %v1351 = vpack.c.b16 %v1346, %v1345
    %v1352 = vpack.c.b16 %v1348, %v1347
    %v1358 = vsel %vm569, %v1316, 0
    %v1361 = vsel %vm569, %v1317, 0
    %1363 = vmatprep.subr.bf16.mxu0 0
    %1364 = vmatpush1.bf16.msra.mxu0 0
    %1365 = vmatprep.subr.bf16.mxu0 0
    %1366 = vmatpush1.bf16.msra.mxu0 0
    %1367 = vmatprep.subr.bf16.mxu0 0
    %1368 = vmatpush1.bf16.msra.mxu0 0
    %1369 = vmatprep.subr.bf16.mxu0 0
    %1370 = vmatpush1.bf16.msra.mxu0 0
    %1371 = vmatprep.subr.bf16.mxu0 0
    %1372 = vmatpush1.bf16.msra.mxu0 %v1352
    %1373 = vmatprep.subr.bf16.mxu0 0
    %1374 = vmatpush1.bf16.msra.mxu0 %v1351
    %1375 = vmatprep.subr.bf16.mxu0 0
    %1376 = vmatpush1.bf16.msra.mxu0 %v1350
    %1377 = vmatprep.subr.bf16.mxu0 0
    %1378 = vmatpush1.bf16.msra.mxu0 %v1349
    %1379 = vmatprep.subr.bf16.mxu0 0
    %1380 = vmatpush2.bf16.msra.mxu0 0
    %1381 = vmatprep.subr.bf16.mxu0 0
    %1382 = vmatpush2.bf16.msra.mxu0 0
    %1383 = vmatprep.subr.bf16.mxu0 0
    %1384 = vmatpush2.bf16.msra.mxu0 0
    %1385 = vmatprep.subr.bf16.mxu0 0
    %1386 = vmatpush2.bf16.msra.mxu0 0
    %1387 = vmatprep.subr.bf16.mxu0 0
    %1388 = vmatpush2.bf16.msra.mxu0 0
    %1389 = vmatprep.subr.bf16.mxu0 0
    %1390 = vmatpush2.bf16.msra.mxu0 0
    %1391 = vmatprep.subr.bf16.mxu0 0
    %1392 = vmatpush2.bf16.msra.mxu0 0
    %1393 = vmatprep.subr.bf16.mxu0 0
    %1394 = vmatpush2.bf16.msra.mxu0 0
    %1395 = vmatprep.mubr.bf16.mxu0 0
    %1396 = vmatmul.mubr.bf16.gmra.mxu0 %v1358
    %v1397 = vpop.f32.mrf.mxu0
    %v1398 = vadd.f32 %v1331, %v1397
    %v1399 = vpop.f32.mrf.mxu0
    %v1400 = vpop.f32.mrf.mxu0
    %v1401 = vadd.f32 %v1331, %v1400
    %v1402 = vpop.f32.mrf.mxu0
    %1403 = vmatprep.mubr.bf16.mxu0 0
    %1404 = vmatmul.mubr.bf16.gmra.mxu0 %v1361
    %v1405 = vpop.f32.mrf.mxu0
    %v1406 = vadd.f32 %v1331, %v1405
    %v1407 = vpop.f32.mrf.mxu0
    %v1408 = vpop.f32.mrf.mxu0
    %v1409 = vadd.f32 %v1331, %v1408
    %v1410 = vpop.f32.mrf.mxu0
    %1411 = vdwg.mxu0
    %vm1412 = vcmp.gt.f32.partialorder %v1398, 0.0
    %vm1413 = vcmp.gt.f32.partialorder %v1401, 0.0
    %vm1414 = vcmp.gt.f32.partialorder %v1406, 0.0
    %vm1415 = vcmp.gt.f32.partialorder %v1409, 0.0
    %v1416 = vmul.f32 %v1398, 0.2
    %v1417 = vmul.f32 %v1401, 0.2
    %v1418 = vmul.f32 %v1406, 0.2
    %v1419 = vmul.f32 %v1409, 0.2
    %v1420 = vsel %vm1412, %v1398, %v1416
    %v1421 = vsel %vm1413, %v1401, %v1417
    %v1422 = vsel %vm1414, %v1406, %v1418
    %v1423 = vsel %vm1415, %v1409, %v1419
    %v1424 = vld [vmem:[%s3 + $0x9] sm:$0x1]
    %v1425 = vld [vmem:[%s3 + $0xa] sm:$0x1]
    %vm1426 = vcmask 64512
    %v1427 = vsel %vm1426, %v1420, 0.0
    %v1428 = vsel %vm1426, %v1421, 0.0
    %v1429 = vadd.f32 %v1427, %v1428
    %v1430 = vsel %vm1426, %v1422, 0.0
    %v1431 = vadd.f32 %v1429, %v1430
    %v1432 = vsel %vm1426, %v1423, 0.0
    %v1433 = vadd.f32 %v1431, %v1432
    %v1434 = vrot.slane %v1433, 4
    %v1435 = vadd.f32 %v1433, %v1434
    %v1436 = vrot.slane %v1435, 2
    %v1437 = vadd.f32 %v1435, %v1436
    %v1438 = vrot.slane %v1437, 1
    %v1439 = vadd.f32 %v1437, %v1438
    %v1440 = vmul.f32 %v1439, 0.03125
    %v1441 = vsub.f32 %v1420, %v1440
    %v1442 = vsub.f32 %v1421, %v1440
    %v1443 = vsub.f32 %v1422, %v1440
    %v1444 = vsub.f32 %v1423, %v1440
    %v1445 = vmul.f32 %v1441, %v1441
    %v1446 = vmul.f32 %v1442, %v1442
    %v1447 = vmul.f32 %v1443, %v1443
    %v1448 = vmul.f32 %v1444, %v1444
    %v1449 = vsel %vm1426, %v1445, 0.0
    %v1450 = vsel %vm1426, %v1446, 0.0
    %v1451 = vadd.f32 %v1449, %v1450
    %v1452 = vsel %vm1426, %v1447, 0.0
    %v1453 = vadd.f32 %v1451, %v1452
    %v1454 = vsel %vm1426, %v1448, 0.0
    %v1455 = vadd.f32 %v1453, %v1454
    %v1456 = vrot.slane %v1455, 4
    %v1457 = vadd.f32 %v1455, %v1456
    %v1458 = vrot.slane %v1457, 2
    %v1459 = vadd.f32 %v1457, %v1458
    %v1460 = vrot.slane %v1459, 1
    %v1461 = vadd.f32 %v1459, %v1460
    %v1462 = vmul.f32 %v1461, 0.03125
    %v1463 = vadd.f32 %v1462, 1e-05
    %v1464 = vrsqrt.pop %v1463
    %v1465 = vmul.f32 %v1441, %v1464
    %v1466 = vmul.f32 %v1442, %v1464
    %v1467 = vmul.f32 %v1443, %v1464
    %v1468 = vmul.f32 %v1444, %v1464
    %v1470 = vlaneseq
    %v1471 = vshrl.u32 %v1470, 7
    %v1472 = vsub.s32 0, %v1471
    %v1473 = vrot.slane %v1424, %v1472
    %v1475 = vmul.f32 %v1465, %v1473
    %v1476 = vmul.f32 %v1466, %v1473
    %v1477 = vmul.f32 %v1467, %v1473
    %v1478 = vmul.f32 %v1468, %v1473
    %v1480 = vlaneseq
    %v1481 = vshrl.u32 %v1480, 7
    %v1482 = vsub.s32 0, %v1481
    %v1483 = vrot.slane %v1425, %v1482
    %v1485 = vadd.f32 %v1475, %v1483
    %v1486 = vadd.f32 %v1476, %v1483
    %v1487 = vadd.f32 %v1477, %v1483
    %v1488 = vadd.f32 %v1478, %v1483
    %v1489 = vpack.c.bf16 %v1486, %v1485
    %v1490 = vpack.c.bf16 %v1488, %v1487
    %v1491 = vld [vmem:[%s2 + $0x298] sm:$0xf]
    %v1493 = vsel %vm1426, %v1489, 0
    %v1496 = vsel %vm1426, %v1490, 0
    %vm1498 = vcmask 1043456
    %v1500 = vsel %vm1498, %v1491, 0
    %1502 = vmatprep.subr.bf16.mxu0 0
    %1503 = vmatpush1.bf16.msra.mxu0 0
    %1504 = vmatprep.subr.bf16.mxu0 0
    %1505 = vmatpush1.bf16.msra.mxu0 0
    %1506 = vmatprep.subr.bf16.mxu0 0
    %1507 = vmatpush1.bf16.msra.mxu0 0
    %1508 = vmatprep.subr.bf16.mxu0 0
    %1509 = vmatpush1.bf16.msra.mxu0 0
    %1510 = vmatprep.subr.bf16.mxu0 0
    %1511 = vmatpush1.bf16.msra.mxu0 0
    %1512 = vmatprep.subr.bf16.mxu0 0
    %1513 = vmatpush1.bf16.msra.mxu0 0
    %1514 = vmatprep.subr.bf16.mxu0 0
    %1515 = vmatpush1.bf16.msra.mxu0 0
    %1516 = vmatprep.subr.bf16.mxu0 0
    %1517 = vmatpush1.bf16.msra.mxu0 %v1500
    %1518 = vmatprep.subr.bf16.mxu0 0
    %1519 = vmatpush2.bf16.msra.mxu0 0
    %1520 = vmatprep.subr.bf16.mxu0 0
    %1521 = vmatpush2.bf16.msra.mxu0 0
    %1522 = vmatprep.subr.bf16.mxu0 0
    %1523 = vmatpush2.bf16.msra.mxu0 0
    %1524 = vmatprep.subr.bf16.mxu0 0
    %1525 = vmatpush2.bf16.msra.mxu0 0
    %1526 = vmatprep.subr.bf16.mxu0 0
    %1527 = vmatpush2.bf16.msra.mxu0 0
    %1528 = vmatprep.subr.bf16.mxu0 0
    %1529 = vmatpush2.bf16.msra.mxu0 0
    %1530 = vmatprep.subr.bf16.mxu0 0
    %1531 = vmatpush2.bf16.msra.mxu0 0
    %1532 = vmatprep.subr.bf16.mxu0 0
    %1533 = vmatpush2.bf16.msra.mxu0 0
    %1534 = vmatprep.mubr.bf16.mxu0 0
    %1535 = vmatmul.mubr.bf16.gmra.mxu0 %v1493
    %v1536 = vpop.f32.mrf.mxu0
    %v1537 = vadd.f32 0.0, %v1536
    %v1538 = vpop.f32.mrf.mxu0
    %v1539 = vpop.f32.mrf.mxu0
    %v1540 = vadd.f32 0.0, %v1539
    %v1541 = vpop.f32.mrf.mxu0
    %1542 = vmatprep.mubr.bf16.mxu0 0
    %1543 = vmatmul.mubr.bf16.gmra.mxu0 %v1496
    %v1544 = vpop.f32.mrf.mxu0
    %v1545 = vadd.f32 0.0, %v1544
    %v1546 = vpop.f32.mrf.mxu0
    %v1547 = vpop.f32.mrf.mxu0
    %v1548 = vadd.f32 0.0, %v1547
    %v1549 = vpop.f32.mrf.mxu0
    %1550 = vdwg.mxu0
    %v1551 = vld [vmem:[%s2 + $0x2a0] sm:$0xf]
    %v1552 = vld [vmem:[%s2 + $0x2a8] sm:$0xf]
    %v1553 = vld [vmem:[%s2 + $0x2b0] sm:$0xf]
    %v1554 = vld [vmem:[%s2 + $0x2b8] sm:$0xf]
    %v1555 = vunpack.c.l.bf16 %v1551
    %v1556 = vunpack.c.l.bf16 %v1552
    %v1557 = vunpack.c.l.bf16 %v1553
    %v1558 = vunpack.c.l.bf16 %v1554
    %v1559 = vmul.f32 %v1537, %v1555
    %v1560 = vmul.f32 %v1540, %v1556
    %v1561 = vmul.f32 %v1545, %v1557
    %v1562 = vmul.f32 %v1548, %v1558
    %v1563 = vld [vmem:[%s2 + $0x290] sm:$0xf]
    %v1564 = vpack.c.bf16 %v1560, %v1559
    %v1565 = vpack.c.bf16 %v1562, %v1561
    %v1567 = vsel %vm107, %v1563, 0
    %1569 = vmatprep.subr.bf16.mxu0 0
    %1570 = vmatpush1.bf16.msra.mxu0 0
    %1571 = vmatprep.subr.bf16.mxu0 0
    %1572 = vmatpush1.bf16.msra.mxu0 0
    %1573 = vmatprep.subr.bf16.mxu0 0
    %1574 = vmatpush1.bf16.msra.mxu0 0
    %1575 = vmatprep.subr.bf16.mxu0 0
    %1576 = vmatpush1.bf16.msra.mxu0 0
    %1577 = vmatprep.subr.bf16.mxu0 0
    %1578 = vmatpush1.bf16.msra.mxu0 0
    %1579 = vmatprep.subr.bf16.mxu0 0
    %1580 = vmatpush1.bf16.msra.mxu0 0
    %1581 = vmatprep.subr.bf16.mxu0 0
    %1582 = vmatpush1.bf16.msra.mxu0 %v1565
    %1583 = vmatprep.subr.bf16.mxu0 0
    %1584 = vmatpush1.bf16.msra.mxu0 %v1564
    %1585 = vmatprep.subr.bf16.mxu0 0
    %1586 = vmatpush2.bf16.msra.mxu0 0
    %1587 = vmatprep.subr.bf16.mxu0 0
    %1588 = vmatpush2.bf16.msra.mxu0 0
    %1589 = vmatprep.subr.bf16.mxu0 0
    %1590 = vmatpush2.bf16.msra.mxu0 0
    %1591 = vmatprep.subr.bf16.mxu0 0
    %1592 = vmatpush2.bf16.msra.mxu0 0
    %1593 = vmatprep.subr.bf16.mxu0 0
    %1594 = vmatpush2.bf16.msra.mxu0 0
    %1595 = vmatprep.subr.bf16.mxu0 0
    %1596 = vmatpush2.bf16.msra.mxu0 0
    %1597 = vmatprep.subr.bf16.mxu0 0
    %1598 = vmatpush2.bf16.msra.mxu0 0
    %1599 = vmatprep.subr.bf16.mxu0 0
    %1600 = vmatpush2.bf16.msra.mxu0 0
    %1601 = vmatprep.mubr.bf16.mxu0 0
    %1602 = vmatmul.mubr.bf16.gmra.mxu0 %v1567
    %v1603 = vpop.f32.mrf.mxu0
    %v1604 = vadd.f32 0.0, %v1603
    %v1605 = vpop.f32.mrf.mxu0
    %v1606 = vpop.f32.mrf.mxu0
    %v1607 = vpop.f32.mrf.mxu0
    %1608 = vdwg.mxu0
    %v1609 = vpack.c.bf16 %v1604, %v1604
    %v1610 = vld [vmem:[%s2 + $0xf0] sm:$0xff]
    %v1611 = vld [vmem:[%s2 + $0xf8] sm:$0xff]
    %v1612 = vld [vmem:[%s2 + $0x100] sm:$0xff]
    %v1613 = vld [vmem:[%s2 + $0x108] sm:$0xff]
    %v1614 = vld [vmem:[%s2 + $0x110] sm:$0xff]
    %v1615 = vld [vmem:[%s2 + $0x118] sm:$0xff]
    %v1616 = vld [vmem:[%s2 + $0x120] sm:$0xff]
    %v1617 = vld [vmem:[%s2 + $0x128] sm:$0xff]
    %v1618 = vld [vmem:[%s2 + $0x130] sm:$0xff]
    %v1619 = vld [vmem:[%s2 + $0x138] sm:$0xff]
    %v1620 = vld [vmem:[%s2 + $0x140] sm:$0xff]
    %v1621 = vld [vmem:[%s2 + $0x148] sm:$0xff]
    %v1622 = vld [vmem:[%s2 + $0x150] sm:$0xff]
    %v1623 = vld [vmem:[%s2 + $0x158] sm:$0xff]
    %v1624 = vld [vmem:[%s2 + $0x160] sm:$0xff]
    %v1625 = vld [vmem:[%s2 + $0x168] sm:$0xff]
    %v1626 = vld [vmem:[%s3 + $0xb] sm:$0x3]
    %v1628 = vlaneseq
    %v1629 = vshrl.u32 %v1628, 7
    %v1630 = vsub.s32 0, %v1629
    %v1631 = vrot.slane %v1626, %v1630
    %v1632 = vlaneseq
    %v1633 = vshrl.u32 %v1632, 7
    %v1634 = vsub.s32 1, %v1633
    %v1635 = vrot.slane %v1626, %v1634
    %v1654 = vunpack.c.l.b16 %v1610
    %v1655 = vunpack.c.h.b16 %v1610
    %v1656 = vunpack.c.l.b16 %v1611
    %v1657 = vunpack.c.h.b16 %v1611
    %v1658 = vunpack.c.l.b16 %v1612
    %v1659 = vunpack.c.h.b16 %v1612
    %v1660 = vunpack.c.l.b16 %v1613
    %v1661 = vunpack.c.h.b16 %v1613
    %v1662 = vunpack.c.l.b16 %v1614
    %v1663 = vunpack.c.h.b16 %v1614
    %v1664 = vunpack.c.l.b16 %v1615
    %v1665 = vunpack.c.h.b16 %v1615
    %v1666 = vunpack.c.l.b16 %v1616
    %v1667 = vunpack.c.h.b16 %v1616
    %v1668 = vunpack.c.l.b16 %v1617
    %v1669 = vunpack.c.h.b16 %v1617
    %v1670 = vunpack.c.l.b16 %v1618
    %v1671 = vunpack.c.h.b16 %v1618
    %v1672 = vunpack.c.l.b16 %v1619
    %v1673 = vunpack.c.h.b16 %v1619
    %v1674 = vunpack.c.l.b16 %v1620
    %v1675 = vunpack.c.h.b16 %v1620
    %v1676 = vunpack.c.l.b16 %v1621
    %v1677 = vunpack.c.h.b16 %v1621
    %v1678 = vunpack.c.l.b16 %v1622
    %v1679 = vunpack.c.h.b16 %v1622
    %v1680 = vunpack.c.l.b16 %v1623
    %v1681 = vunpack.c.h.b16 %v1623
    %v1682 = vunpack.c.l.b16 %v1624
    %v1683 = vunpack.c.h.b16 %v1624
    %v1684 = vunpack.c.l.b16 %v1625
    %v1685 = vunpack.c.h.b16 %v1625
    %v1686 = vpack.c.b16 %v1656, %v1654
    %v1687 = vpack.c.b16 %v1657, %v1655
    %v1688 = vpack.c.b16 %v1660, %v1658
    %v1689 = vpack.c.b16 %v1661, %v1659
    %v1690 = vpack.c.b16 %v1664, %v1662
    %v1691 = vpack.c.b16 %v1665, %v1663
    %v1692 = vpack.c.b16 %v1668, %v1666
    %v1693 = vpack.c.b16 %v1669, %v1667
    %v1694 = vpack.c.b16 %v1672, %v1670
    %v1695 = vpack.c.b16 %v1673, %v1671
    %v1696 = vpack.c.b16 %v1676, %v1674
    %v1697 = vpack.c.b16 %v1677, %v1675
    %v1698 = vpack.c.b16 %v1680, %v1678
    %v1699 = vpack.c.b16 %v1681, %v1679
    %v1700 = vpack.c.b16 %v1684, %v1682
    %v1701 = vpack.c.b16 %v1685, %v1683
    %1718 = vmatprep.subr.bf16.mxu0 %v1701
    %1719 = vmatpush1.bf16.msra.mxu0 %v1700
    %1720 = vmatprep.subr.bf16.mxu0 %v1699
    %1721 = vmatpush1.bf16.msra.mxu0 %v1698
    %1722 = vmatprep.subr.bf16.mxu0 %v1697
    %1723 = vmatpush1.bf16.msra.mxu0 %v1696
    %1724 = vmatprep.subr.bf16.mxu0 %v1695
    %1725 = vmatpush1.bf16.msra.mxu0 %v1694
    %1726 = vmatprep.subr.bf16.mxu0 %v1693
    %1727 = vmatpush1.bf16.msra.mxu0 %v1692
    %1728 = vmatprep.subr.bf16.mxu0 %v1691
    %1729 = vmatpush1.bf16.msra.mxu0 %v1690
    %1730 = vmatprep.subr.bf16.mxu0 %v1689
    %1731 = vmatpush1.bf16.msra.mxu0 %v1688
    %1732 = vmatprep.subr.bf16.mxu0 %v1687
    %1733 = vmatpush1.bf16.msra.mxu0 %v1686
    %1734 = vmatprep.subr.bf16.mxu0 0
    %1735 = vmatpush2.bf16.msra.mxu0 0
    %1736 = vmatprep.subr.bf16.mxu0 0
    %1737 = vmatpush2.bf16.msra.mxu0 0
    %1738 = vmatprep.subr.bf16.mxu0 0
    %1739 = vmatpush2.bf16.msra.mxu0 0
    %1740 = vmatprep.subr.bf16.mxu0 0
    %1741 = vmatpush2.bf16.msra.mxu0 0
    %1742 = vmatprep.subr.bf16.mxu0 0
    %1743 = vmatpush2.bf16.msra.mxu0 0
    %1744 = vmatprep.subr.bf16.mxu0 0
    %1745 = vmatpush2.bf16.msra.mxu0 0
    %1746 = vmatprep.subr.bf16.mxu0 0
    %1747 = vmatpush2.bf16.msra.mxu0 0
    %1748 = vmatprep.subr.bf16.mxu0 0
    %1749 = vmatpush2.bf16.msra.mxu0 0
    %1750 = vmatprep.mubr.bf16.mxu0 0
    %1751 = vmatmul.mubr.bf16.gmra.mxu0 %v1609
    %v1752 = vpop.f32.mrf.mxu0
    %v1753 = vadd.f32 %v1631, %v1752
    %v1754 = vpop.f32.mrf.mxu0
    %v1755 = vadd.f32 %v1635, %v1754
    %v1756 = vpop.f32.mrf.mxu0
    %v1757 = vpop.f32.mrf.mxu0
    %1758 = vdwg.mxu0
    %vm1759 = vcmp.gt.f32.partialorder %v1753, 0.0
    %vm1760 = vcmp.gt.f32.partialorder %v1755, 0.0
    %v1761 = vmul.f32 %v1753, 0.2
    %v1762 = vmul.f32 %v1755, 0.2
    %v1763 = vsel %vm1759, %v1753, %v1761
    %v1764 = vsel %vm1760, %v1755, %v1762
    %v1765 = vpack.c.bf16 %v1763, %v1763
    %v1766 = vpack.c.bf16 %v1764, %v1764
    %v1767 = vld [vmem:[%s2 + $0x170] sm:$0xf]
    %v1768 = vld [vmem:[%s2 + $0x178] sm:$0xf]
    %v1769 = vld [vmem:[%s2 + $0x180] sm:$0xf]
    %v1770 = vld [vmem:[%s2 + $0x188] sm:$0xf]
    %v1771 = vld [vmem:[%s2 + $0x190] sm:$0xf]
    %v1772 = vld [vmem:[%s2 + $0x198] sm:$0xf]
    %v1773 = vld [vmem:[%s2 + $0x1a0] sm:$0xf]
    %v1774 = vld [vmem:[%s2 + $0x1a8] sm:$0xf]
    %v1775 = vld [vmem:[%s2 + $0x1b0] sm:$0xf]
    %v1776 = vld [vmem:[%s2 + $0x1b8] sm:$0xf]
    %v1777 = vld [vmem:[%s2 + $0x1c0] sm:$0xf]
    %v1778 = vld [vmem:[%s2 + $0x1c8] sm:$0xf]
    %v1779 = vld [vmem:[%s2 + $0x1d0] sm:$0xf]
    %v1780 = vld [vmem:[%s2 + $0x1d8] sm:$0xf]
    %v1781 = vld [vmem:[%s2 + $0x1e0] sm:$0xf]
    %v1782 = vld [vmem:[%s2 + $0x1e8] sm:$0xf]
    %v1783 = vld [vmem:[%s2 + $0x1f0] sm:$0xf]
    %v1784 = vld [vmem:[%s2 + $0x1f8] sm:$0xf]
    %v1785 = vld [vmem:[%s2 + $0x200] sm:$0xf]
    %v1786 = vld [vmem:[%s2 + $0x208] sm:$0xf]
    %v1787 = vld [vmem:[%s2 + $0x210] sm:$0xf]
    %v1788 = vld [vmem:[%s2 + $0x218] sm:$0xf]
    %v1789 = vld [vmem:[%s2 + $0x220] sm:$0xf]
    %v1790 = vld [vmem:[%s2 + $0x228] sm:$0xf]
    %v1791 = vld [vmem:[%s2 + $0x230] sm:$0xf]
    %v1792 = vld [vmem:[%s2 + $0x238] sm:$0xf]
    %v1793 = vld [vmem:[%s2 + $0x240] sm:$0xf]
    %v1794 = vld [vmem:[%s2 + $0x248] sm:$0xf]
    %v1795 = vld [vmem:[%s2 + $0x250] sm:$0xf]
    %v1796 = vld [vmem:[%s2 + $0x258] sm:$0xf]
    %v1797 = vld [vmem:[%s2 + $0x260] sm:$0xf]
    %v1798 = vld [vmem:[%s2 + $0x268] sm:$0xf]
    %v1799 = vld [vmem:[%s3 + $0xd] sm:$0x1]
    %v1801 = vlaneseq
    %v1802 = vshrl.u32 %v1801, 7
    %v1803 = vsub.s32 0, %v1802
    %v1804 = vrot.slane %v1799, %v1803
    %v1838 = vunpack.c.l.b16 %v1767
    %v1839 = vunpack.c.l.b16 %v1768
    %v1840 = vunpack.c.l.b16 %v1769
    %v1841 = vunpack.c.l.b16 %v1770
    %v1842 = vunpack.c.l.b16 %v1771
    %v1843 = vunpack.c.l.b16 %v1772
    %v1844 = vunpack.c.l.b16 %v1773
    %v1845 = vunpack.c.l.b16 %v1774
    %v1846 = vunpack.c.l.b16 %v1775
    %v1847 = vunpack.c.l.b16 %v1776
    %v1848 = vunpack.c.l.b16 %v1777
    %v1849 = vunpack.c.l.b16 %v1778
    %v1850 = vunpack.c.l.b16 %v1779
    %v1851 = vunpack.c.l.b16 %v1780
    %v1852 = vunpack.c.l.b16 %v1781
    %v1853 = vunpack.c.l.b16 %v1782
    %v1854 = vunpack.c.l.b16 %v1783
    %v1855 = vunpack.c.l.b16 %v1784
    %v1856 = vunpack.c.l.b16 %v1785
    %v1857 = vunpack.c.l.b16 %v1786
    %v1858 = vunpack.c.l.b16 %v1787
    %v1859 = vunpack.c.l.b16 %v1788
    %v1860 = vunpack.c.l.b16 %v1789
    %v1861 = vunpack.c.l.b16 %v1790
    %v1862 = vunpack.c.l.b16 %v1791
    %v1863 = vunpack.c.l.b16 %v1792
    %v1864 = vunpack.c.l.b16 %v1793
    %v1865 = vunpack.c.l.b16 %v1794
    %v1866 = vunpack.c.l.b16 %v1795
    %v1867 = vunpack.c.l.b16 %v1796
    %v1868 = vunpack.c.l.b16 %v1797
    %v1869 = vunpack.c.l.b16 %v1798
    %v1870 = vpack.c.b16 %v1839, %v1838
    %v1871 = vpack.c.b16 %v1841, %v1840
    %v1872 = vpack.c.b16 %v1843, %v1842
    %v1873 = vpack.c.b16 %v1845, %v1844
    %v1874 = vpack.c.b16 %v1847, %v1846
    %v1875 = vpack.c.b16 %v1849, %v1848
    %v1876 = vpack.c.b16 %v1851, %v1850
    %v1877 = vpack.c.b16 %v1853, %v1852
    %v1878 = vpack.c.b16 %v1855, %v1854
    %v1879 = vpack.c.b16 %v1857, %v1856
    %v1880 = vpack.c.b16 %v1859, %v1858
    %v1881 = vpack.c.b16 %v1861, %v1860
    %v1882 = vpack.c.b16 %v1863, %v1862
    %v1883 = vpack.c.b16 %v1865, %v1864
    %v1884 = vpack.c.b16 %v1867, %v1866
    %v1885 = vpack.c.b16 %v1869, %v1868
    %1902 = vmatprep.subr.bf16.mxu0 0
    %1903 = vmatpush1.bf16.msra.mxu0 %v1877
    %1904 = vmatprep.subr.bf16.mxu0 0
    %1905 = vmatpush1.bf16.msra.mxu0 %v1876
    %1906 = vmatprep.subr.bf16.mxu0 0
    %1907 = vmatpush1.bf16.msra.mxu0 %v1875
    %1908 = vmatprep.subr.bf16.mxu0 0
    %1909 = vmatpush1.bf16.msra.mxu0 %v1874
    %1910 = vmatprep.subr.bf16.mxu0 0
    %1911 = vmatpush1.bf16.msra.mxu0 %v1873
    %1912 = vmatprep.subr.bf16.mxu0 0
    %1913 = vmatpush1.bf16.msra.mxu0 %v1872
    %1914 = vmatprep.subr.bf16.mxu0 0
    %1915 = vmatpush1.bf16.msra.mxu0 %v1871
    %1916 = vmatprep.subr.bf16.mxu0 0
    %1917 = vmatpush1.bf16.msra.mxu0 %v1870
    %1918 = vmatprep.subr.bf16.mxu0 0
    %1919 = vmatpush2.bf16.msra.mxu0 %v1885
    %1920 = vmatprep.subr.bf16.mxu0 0
    %1921 = vmatpush2.bf16.msra.mxu0 %v1884
    %1922 = vmatprep.subr.bf16.mxu0 0
    %1923 = vmatpush2.bf16.msra.mxu0 %v1883
    %1924 = vmatprep.subr.bf16.mxu0 0
    %1925 = vmatpush2.bf16.msra.mxu0 %v1882
    %1926 = vmatprep.subr.bf16.mxu0 0
    %1927 = vmatpush2.bf16.msra.mxu0 %v1881
    %1928 = vmatprep.subr.bf16.mxu0 0
    %1929 = vmatpush2.bf16.msra.mxu0 %v1880
    %1930 = vmatprep.subr.bf16.mxu0 0
    %1931 = vmatpush2.bf16.msra.mxu0 %v1879
    %1932 = vmatprep.subr.bf16.mxu0 0
    %1933 = vmatpush2.bf16.msra.mxu0 %v1878
    %1934 = vmatprep.mubr.bf16.mxu0 %v1766
    %1935 = vmatmul.mubr.bf16.gmra.mxu0 %v1765
    %v1936 = vpop.f32.mrf.mxu0
    %v1937 = vadd.f32 %v1804, %v1936
    %v1938 = vpop.f32.mrf.mxu0
    %v1939 = vpop.f32.mrf.mxu0
    %v1940 = vpop.f32.mrf.mxu0
    %1941 = vdwg.mxu0
    %vm1942 = vcmp.gt.f32.partialorder %v1937, 0.0
    %v1943 = vmul.f32 %v1937, 0.2
    %v1944 = vsel %vm1942, %v1937, %v1943
    %v1945 = vpack.c.bf16 %v1944, %v1944
    %v1946 = vld [vmem:[%s2 + $0x270] sm:$0xf]
    %v1947 = vld [vmem:[%s2 + $0x278] sm:$0xf]
    %v1948 = vld [vmem:[%s2 + $0x280] sm:$0xf]
    %v1949 = vld [vmem:[%s2 + $0x288] sm:$0xf]
    %v1950 = vld [vmem:[%s3 + $0xe] sm:$0x1]
    %v1952 = vlaneseq
    %v1953 = vshrl.u32 %v1952, 7
    %v1954 = vsub.s32 0, %v1953
    %v1955 = vrot.slane %v1950, %v1954
    %v1961 = vunpack.c.l.b16 %v1946
    %v1962 = vunpack.c.l.b16 %v1947
    %v1963 = vunpack.c.l.b16 %v1948
    %v1964 = vunpack.c.l.b16 %v1949
    %v1965 = vpack.c.b16 %v1962, %v1961
    %v1966 = vpack.c.b16 %v1964, %v1963
    %v1970 = vsel %vm107, %v1945, 0
    %1972 = vmatprep.subr.bf16.mxu0 0
    %1973 = vmatpush1.bf16.msra.mxu0 0
    %1974 = vmatprep.subr.bf16.mxu0 0
    %1975 = vmatpush1.bf16.msra.mxu0 0
    %1976 = vmatprep.subr.bf16.mxu0 0
    %1977 = vmatpush1.bf16.msra.mxu0 0
    %1978 = vmatprep.subr.bf16.mxu0 0
    %1979 = vmatpush1.bf16.msra.mxu0 0
    %1980 = vmatprep.subr.bf16.mxu0 0
    %1981 = vmatpush1.bf16.msra.mxu0 0
    %1982 = vmatprep.subr.bf16.mxu0 0
    %1983 = vmatpush1.bf16.msra.mxu0 0
    %1984 = vmatprep.subr.bf16.mxu0 0
    %1985 = vmatpush1.bf16.msra.mxu0 %v1966
    %1986 = vmatprep.subr.bf16.mxu0 0
    %1987 = vmatpush1.bf16.msra.mxu0 %v1965
    %1988 = vmatprep.subr.bf16.mxu0 0
    %1989 = vmatpush2.bf16.msra.mxu0 0
    %1990 = vmatprep.subr.bf16.mxu0 0
    %1991 = vmatpush2.bf16.msra.mxu0 0
    %1992 = vmatprep.subr.bf16.mxu0 0
    %1993 = vmatpush2.bf16.msra.mxu0 0
    %1994 = vmatprep.subr.bf16.mxu0 0
    %1995 = vmatpush2.bf16.msra.mxu0 0
    %1996 = vmatprep.subr.bf16.mxu0 0
    %1997 = vmatpush2.bf16.msra.mxu0 0
    %1998 = vmatprep.subr.bf16.mxu0 0
    %1999 = vmatpush2.bf16.msra.mxu0 0
    %2000 = vmatprep.subr.bf16.mxu0 0
    %2001 = vmatpush2.bf16.msra.mxu0 0
    %2002 = vmatprep.subr.bf16.mxu0 0
    %2003 = vmatpush2.bf16.msra.mxu0 0
    %2004 = vmatprep.mubr.bf16.mxu0 0
    %2005 = vmatmul.mubr.bf16.gmra.mxu0 %v1970
    %v2006 = vpop.f32.mrf.mxu0
    %v2007 = vadd.f32 %v1955, %v2006
    %v2008 = vpop.f32.mrf.mxu0
    %v2009 = vpop.f32.mrf.mxu0
    %v2010 = vpop.f32.mrf.mxu0
    %2011 = vdwg.mxu0
    %vm2012 = vcmask 9216
    %2013 = vst.msk [vmem:[#allocation2] sm:$0x3] %vm2012, %v2007
    // Predicated region
    $region18: #{gat_forward.1} parent=1 // pred_check
      _
    $region19: #{gat_forward.1} parent=1 // pred_check_branch
      %2015 = sbr.rel (0) target = $region21
    $region20: #{gat_forward.1} parent=1 // pred_region
      %s2017 = ssub.s32 32, 32
      %2018 = vsyncadd [#allocation3], %s2017
      %s2020 = sshll.u32 [#allocation2], 4
      %s2021 = int_to_ptr.vmem [resolvable:$true] %s2020
      %2023 = dma.vmem_to_hbm [thread:$0]  %s2021, 32, %s4, [#allocation3]
    $region21: #{gat_forward.1} parent=1 // pred_fallthru
      _
    // Predicated region
    $region22: #{gat_forward.1} parent=1 // pred_check
      _
    $region23: #{gat_forward.1} parent=1 // pred_check_branch
      %2025 = sbr.rel (0) target = $region25
    $region24: #{gat_forward.1} parent=1 // pred_region
      %2026 = dma.done [#allocation3], 32
    $region25: #{gat_forward.1} parent=1 // pred_fallthru
      _
    %2027 = vsyncpa [#allocation3], 1

</llo_original>
